<compile_context>
chip_gen: v6e
topology: v6e:2x2x1
jax: 0.10.0
libtpu: 0.0.40
codegen_flags: <defaults>
</compile_context>

<pallas_src>
import functools
import math

import jax
import jax.numpy as jnp
from jax.experimental import pallas as pl
from jax.experimental.pallas import tpu as pltpu


# ----------------------------------------------------------------------------
# in-kernel math helpers
# ----------------------------------------------------------------------------
def _erf_approx(x):
    # Abramowitz & Stegun 7.1.26 polynomial erf (max abs err ~1.5e-7), so the
    # exact (erf-based) GELU of PyTorch nn.GELU lowers cleanly on Mosaic.
    a1, a2, a3, a4, a5 = 0.254829592, -0.284496736, 1.421413741, -1.453152027, 1.061405429
    p = 0.3275911
    z = jnp.abs(x)
    t = 1.0 / (1.0 + p * z)
    poly = ((((a5 * t + a4) * t + a3) * t + a2) * t + a1) * t
    y = 1.0 - poly * jnp.exp(-z * z)
    return jnp.where(x < 0, -y, y)


def _gelu_exact(x):
    return 0.5 * x * (1.0 + _erf_approx(x * 0.7071067811865476))


def _layernorm(x, w, b, eps=1e-5):
    mu = jnp.mean(x, axis=-1, keepdims=True)
    var = jnp.mean((x - mu) ** 2, axis=-1, keepdims=True)
    return (x - mu) * jax.lax.rsqrt(var + eps) * w + b


# ----------------------------------------------------------------------------
# fused transformer-blocks kernel (grid axis = layer, activations VMEM-resident)
# ----------------------------------------------------------------------------
def blocks_kernel(x_ref, wqkv_ref, bqkv_ref, wo_ref, bo_ref,
                  g1_ref, b1_ref, w1_ref, bb1_ref, w2_ref, bb2_ref,
                  g2_ref, b2_ref, o_ref, carry_ref, *, batch, seq, num_heads):
    layer = pl.program_id(0)

    @pl.when(layer == 0)
    def _():
        carry_ref[...] = x_ref[...]

    E = x_ref.shape[1]
    H = num_heads
    hd = E // H
    scale = 1.0 / math.sqrt(hd)

    x = carry_ref[...]                                           # (B*S, E)

    # --- QKV projection (MXU) ---
    qkv = jnp.dot(x, wqkv_ref[...], preferred_element_type=jnp.float32) + bqkv_ref[...]

    # --- multi-head attention over axis 0 (batch_first=False quirk: L = batch,
    # N = seq).  Attention length == batch, which is tiny, so the (head, query
    # group, key group) loops are statically unrolled and everything stays 2-D
    # VPU work (broadcast-mul + lane reductions); no tiny MXU matmuls. ---
    ctx_rows = []
    for b in range(batch):
        head_outs = []
        q_rows = slice(b * seq, (b + 1) * seq)
        for h in range(H):
            q_bh = qkv[q_rows, h * hd:(h + 1) * hd]              # (S, hd)
            score_cols = []
            for c in range(batch):
                k_ch = qkv[c * seq:(c + 1) * seq, E + h * hd:E + (h + 1) * hd]
                score_cols.append(
                    jnp.sum(q_bh * k_ch, axis=-1, keepdims=True) * scale)   # (S, 1)
            s = jnp.concatenate(score_cols, axis=-1)             # (S, B)
            m = jnp.max(s, axis=-1, keepdims=True)
            p = jnp.exp(s - m)
            p = p * pl.reciprocal(jnp.sum(p, axis=-1, keepdims=True), approx=True)
            c_bh = jnp.zeros((seq, hd), jnp.float32)
            for c in range(batch):
                v_ch = qkv[c * seq:(c + 1) * seq, 2 * E + h * hd:2 * E + (h + 1) * hd]
                c_bh = c_bh + p[:, c:c + 1] * v_ch               # (S, hd)
            head_outs.append(c_bh)
        ctx_rows.append(jnp.concatenate(head_outs, axis=-1))     # (S, E)
    ctx = jnp.concatenate(ctx_rows, axis=0)                      # (B*S, E)

    # --- out-projection + residual + LN1 ---
    attn = jnp.dot(ctx, wo_ref[...], preferred_element_type=jnp.float32) + bo_ref[...]
    y = _layernorm(x + attn, g1_ref[...], b1_ref[...])

    # --- FFN (GELU) + residual + LN2 ---
    h1 = jnp.dot(y, w1_ref[...], preferred_element_type=jnp.float32) + bb1_ref[...]
    h1 = _gelu_exact(h1)
    f = jnp.dot(h1, w2_ref[...], preferred_element_type=jnp.float32) + bb2_ref[...]
    out = _layernorm(y + f, g2_ref[...], b2_ref[...])

    carry_ref[...] = out
    o_ref[...] = out          # same block index every layer -> stays VMEM-resident


# ----------------------------------------------------------------------------
# final LayerNorm + fc_out kernel (grid-tiled over rows x vocab)
# ----------------------------------------------------------------------------
def final_kernel(x_ref, g_ref, b_ref, w_ref, bb_ref, o_ref):
    xn = _layernorm(x_ref[...], g_ref[...], b_ref[...])
    o_ref[...] = (jnp.dot(xn, w_ref[...], preferred_element_type=jnp.float32)
                  + bb_ref[...])


def _pick_tile(n, candidates):
    for c in candidates:
        if c <= n and n % c == 0:
            return c
    return n


# ----------------------------------------------------------------------------
# wrapper
# ----------------------------------------------------------------------------
def pallas_forward(input_ids, packed):
    B, S = input_ids.shape
    E = packed["embed_dim"]
    V = packed["vocab_size"]
    H = packed["num_heads"]
    L = packed["num_layers"]
    R = B * S

    # Embedding lookups are gathers -> plain JAX glue.
    x = (packed["tok_emb"][input_ids]
         + packed["pos_emb"][:S][None, :, :]).astype(jnp.float32)
    x2 = x.reshape(R, E)

    # --- all transformer blocks in ONE pallas_call ---
    layer_spec = lambda shape: pl.BlockSpec(shape, lambda l: (l, 0, 0))
    blk = pl.pallas_call(
        functools.partial(blocks_kernel, batch=B, seq=S, num_heads=H),
        grid=(L,),
        in_specs=[
            pl.BlockSpec((R, E), lambda l: (0, 0)),          # x (resident)
            layer_spec((None, E, 3 * E)),                    # wqkv
            layer_spec((None, 1, 3 * E)),                    # bqkv
            layer_spec((None, E, E)),                        # wo
            layer_spec((None, 1, E)),                        # bo
            layer_spec((None, 1, E)),                        # ln1 w
            layer_spec((None, 1, E)),                        # ln1 b
            layer_spec((None, E, 4 * E)),                    # ffn w1
            layer_spec((None, 1, 4 * E)),                    # ffn b1
            layer_spec((None, 4 * E, E)),                    # ffn w2
            layer_spec((None, 1, E)),                        # ffn b2
            layer_spec((None, 1, E)),                        # ln2 w
            layer_spec((None, 1, E)),                        # ln2 b
        ],
        out_specs=pl.BlockSpec((R, E), lambda l: (0, 0)),
        out_shape=jax.ShapeDtypeStruct((R, E), jnp.float32),
        scratch_shapes=[pltpu.VMEM((R, E), jnp.float32)],    # activation carry
        compiler_params=pltpu.CompilerParams(
            dimension_semantics=("arbitrary",)),
    )
    y2 = blk(x2, packed["wqkv"], packed["bqkv"], packed["wo"], packed["bo"],
             packed["g1"], packed["b1"], packed["w1"], packed["bb1"],
             packed["w2"], packed["bb2"], packed["g2"], packed["b2"])

    # --- final LayerNorm + fc_out, tiled over (rows, vocab) ---
    tr = _pick_tile(R, (512, 256, 128, 64, 32, 16, 8))
    tv = _pick_tile(V, (2048, 1024, 512, 256, 128))
    logits2 = pl.pallas_call(
        final_kernel,
        grid=(pl.cdiv(R, tr), pl.cdiv(V, tv)),
        in_specs=[
            pl.BlockSpec((tr, E), lambda i, j: (i, 0)),
            pl.BlockSpec((1, E), lambda i, j: (0, 0)),
            pl.BlockSpec((1, E), lambda i, j: (0, 0)),
            pl.BlockSpec((E, tv), lambda i, j: (0, j)),
            pl.BlockSpec((1, tv), lambda i, j: (0, j)),
        ],
        out_specs=pl.BlockSpec((tr, tv), lambda i, j: (i, j)),
        out_shape=jax.ShapeDtypeStruct((R, V), jnp.float32),
        compiler_params=pltpu.CompilerParams(
            dimension_semantics=("parallel", "parallel")),
    )(y2, packed["lnf_w"], packed["lnf_b"], packed["fc_w"], packed["fc_b"])

    return logits2.reshape(B, S, V)


# ----------------------------------------------------------------------------
# parameters: PyTorch-shaped init, then pack (transpose + stack) ONCE
# ----------------------------------------------------------------------------
def init_params(key, vocab_size, embed_dim, num_heads, num_layers, max_len):
    def nrm(k, shape, scale=0.02):
        return scale * jax.random.normal(k, shape, dtype=jnp.float32)

    keys = jax.random.split(key, 5 + num_layers)
    P = dict(vocab_size=vocab_size, embed_dim=embed_dim, num_heads=num_heads)
    P["tok_emb"] = nrm(keys[0], (vocab_size, embed_dim))
    P["pos_emb"] = nrm(keys[1], (max_len, embed_dim))
    P["lnf_w"] = jnp.ones((embed_dim,), jnp.float32)
    P["lnf_b"] = jnp.zeros((embed_dim,), jnp.float32)
    P["fc_w"] = nrm(keys[2], (vocab_size, embed_dim))
    P["fc_b"] = nrm(keys[3], (vocab_size,), 0.01)

    layers = []
    for l in range(num_layers):
        lk = jax.random.split(keys[5 + l], 8)
        layers.append(dict(
            in_proj_w=nrm(lk[0], (3 * embed_dim, embed_dim)),
            in_proj_b=nrm(lk[1], (3 * embed_dim,), 0.01),
            out_proj_w=nrm(lk[2], (embed_dim, embed_dim)),
            out_proj_b=nrm(lk[3], (embed_dim,), 0.01),
            ln1_w=jnp.ones((embed_dim,), jnp.float32),
            ln1_b=jnp.zeros((embed_dim,), jnp.float32),
            ln2_w=jnp.ones((embed_dim,), jnp.float32),
            ln2_b=jnp.zeros((embed_dim,), jnp.float32),
            ffn_w1=nrm(lk[4], (4 * embed_dim, embed_dim)),
            ffn_b1=nrm(lk[5], (4 * embed_dim,), 0.01),
            ffn_w2=nrm(lk[6], (embed_dim, 4 * embed_dim)),
            ffn_b2=nrm(lk[7], (embed_dim,), 0.01),
        ))
    P["layers"] = layers
    return P


def pack_params(P):
    """Pre-transpose weights to (in, out) and stack per-layer tensors once."""
    layers = P["layers"]

    def stack(name, fn):
        return jnp.stack([fn(lp[name]) for lp in layers], axis=0)

    row = lambda v: v[None, :]
    return dict(
        vocab_size=P["vocab_size"], embed_dim=P["embed_dim"],
        num_heads=P["num_heads"], num_layers=len(layers),
        tok_emb=P["tok_emb"], pos_emb=P["pos_emb"],
        wqkv=stack("in_proj_w", lambda w: w.T),       # (L, E, 3E)
        bqkv=stack("in_proj_b", row),                 # (L, 1, 3E)
        wo=stack("out_proj_w", lambda w: w.T),        # (L, E, E)
        bo=stack("out_proj_b", row),                  # (L, 1, E)
        g1=stack("ln1_w", row), b1=stack("ln1_b", row),
        w1=stack("ffn_w1", lambda w: w.T),            # (L, E, 4E)
        bb1=stack("ffn_b1", row),                     # (L, 1, 4E)
        w2=stack("ffn_w2", lambda w: w.T),            # (L, 4E, E)
        bb2=stack("ffn_b2", row),                     # (L, 1, E)
        g2=stack("ln2_w", row), b2=stack("ln2_b", row),
        lnf_w=P["lnf_w"][None, :], lnf_b=P["lnf_b"][None, :],
        fc_w=P["fc_w"].T,                             # (E, V)
        fc_b=P["fc_b"][None, :],                      # (1, V)
    )


# ----------------------------------------------------------------------------
# pure-JAX reference (mirrors PyTorch eval-mode forward exactly)
# ----------------------------------------------------------------------------
def ref_layernorm(x, w, b, eps=1e-5):
    mu = x.mean(-1, keepdims=True)
    var = ((x - mu) ** 2).mean(-1, keepdims=True)
    return (x - mu) / jnp.sqrt(var + eps) * w + b


def ref_block(x, lp, H):
    B, S, E = x.shape
    hd = E // H
    qkv = x @ lp["in_proj_w"].T + lp["in_proj_b"]
    q, k, v = jnp.split(qkv, 3, axis=-1)

    def sh(t):  # (L=B, N=S, E) -> (N=S, H, L=B, hd)
        return t.reshape(B, S, H, hd).transpose(1, 2, 0, 3)

    qh, kh, vh = sh(q), sh(k), sh(v)
    s = jnp.einsum("nhld,nhmd->nhlm", qh, kh) / math.sqrt(hd)
    p = jax.nn.softmax(s, axis=-1)
    ctx = jnp.einsum("nhlm,nhmd->nhld", p, vh).transpose(2, 0, 1, 3).reshape(B, S, E)
    attn = ctx @ lp["out_proj_w"].T + lp["out_proj_b"]
    y = ref_layernorm(x + attn, lp["ln1_w"], lp["ln1_b"])
    h = y @ lp["ffn_w1"].T + lp["ffn_b1"]
    h = 0.5 * h * (1.0 + jax.scipy.special.erf(h / math.sqrt(2.0)))  # exact GELU
    f = h @ lp["ffn_w2"].T + lp["ffn_b2"]
    return ref_layernorm(y + f, lp["ln2_w"], lp["ln2_b"])


def reference_forward(input_ids, P):
    S = input_ids.shape[1]
    x = (P["tok_emb"][input_ids]
         + P["pos_emb"][jnp.arange(S)][None, :, :]).astype(jnp.float32)
    for lp in P["layers"]:
        x = ref_block(x, lp, P["num_heads"])
    x = ref_layernorm(x, P["lnf_w"], P["lnf_b"])
    return x @ P["fc_w"].T + P["fc_b"]


# ----------------------------------------------------------------------------
if __name__ == "__main__":
    vocab_size, embed_dim, num_heads, num_layers, max_len = 128, 32, 4, 2, 16
    B, S = 2, 8

    key = jax.random.PRNGKey(0)
    pkey, ikey = jax.random.split(key)
    P = init_params(pkey, vocab_size, embed_dim, num_heads, num_layers, max_len)
    packed = pack_params(P)
    input_ids = jax.random.randint(ikey, (B, S), 0, vocab_size, dtype=jnp.int32)

    logits = pallas_forward(input_ids, packed)
    logits = jax.block_until_ready(logits)

    ref = reference_forward(input_ids, P)
    assert logits.shape == (B, S, vocab_size), logits.shape
    assert bool(jnp.all(jnp.isfinite(logits)))
    max_err = float(jnp.max(jnp.abs(logits - ref)))
    assert bool(jnp.allclose(logits, ref, atol=2e-3, rtol=2e-3)), max_err
    print("KERNEL_OK")
</pallas_src>

<mosaic_0001>
module attributes {stable_mosaic.version = 11 : i64} {
  func.func @blocks_kernel(%arg0: i32, %arg1: memref<16x32xf32, #tpu.memory_space<vmem>>, %arg2: memref<1x32x96xf32, #tpu.memory_space<vmem>>, %arg3: memref<1x1x96xf32, #tpu.memory_space<vmem>>, %arg4: memref<1x32x32xf32, #tpu.memory_space<vmem>>, %arg5: memref<1x1x32xf32, #tpu.memory_space<vmem>>, %arg6: memref<1x1x32xf32, #tpu.memory_space<vmem>>, %arg7: memref<1x1x32xf32, #tpu.memory_space<vmem>>, %arg8: memref<1x32x128xf32, #tpu.memory_space<vmem>>, %arg9: memref<1x1x128xf32, #tpu.memory_space<vmem>>, %arg10: memref<1x128x32xf32, #tpu.memory_space<vmem>>, %arg11: memref<1x1x32xf32, #tpu.memory_space<vmem>>, %arg12: memref<1x1x32xf32, #tpu.memory_space<vmem>>, %arg13: memref<1x1x32xf32, #tpu.memory_space<vmem>>, %arg14: memref<16x32xf32, #tpu.memory_space<vmem>>, %arg15: memref<16x32xf32, #tpu.memory_space<vmem>>) attributes {dimension_semantics = [#tpu.dimension_semantics<arbitrary>], iteration_bounds = array<i64: 2>, scalar_prefetch = 0 : i64, scratch_operands = 1 : i64, tpu.core_type = #tpu.core_type<tc>, window_params = [{pipeline_mode = #tpu.pipeline_mode<synchronous>, transform_indices = @transform_0, window_bounds = array<i64: 16, 32>}, {transform_indices = @transform_1, window_bounds = array<i64: 1, 32, 96>}, {transform_indices = @transform_2, window_bounds = array<i64: 1, 1, 96>}, {transform_indices = @transform_3, window_bounds = array<i64: 1, 32, 32>}, {transform_indices = @transform_4, window_bounds = array<i64: 1, 1, 32>}, {transform_indices = @transform_5, window_bounds = array<i64: 1, 1, 32>}, {transform_indices = @transform_6, window_bounds = array<i64: 1, 1, 32>}, {transform_indices = @transform_7, window_bounds = array<i64: 1, 32, 128>}, {transform_indices = @transform_8, window_bounds = array<i64: 1, 1, 128>}, {transform_indices = @transform_9, window_bounds = array<i64: 1, 128, 32>}, {transform_indices = @transform_10, window_bounds = array<i64: 1, 1, 32>}, {transform_indices = @transform_11, window_bounds = array<i64: 1, 1, 32>}, {transform_indices = @transform_12, window_bounds = array<i64: 1, 1, 32>}, {pipeline_mode = #tpu.pipeline_mode<synchronous>, transform_indices = @transform_13, window_bounds = array<i64: 16, 32>}]} {
    %c0_i32 = arith.constant 0 : i32
    %0 = arith.cmpi eq, %arg0, %c0_i32 : i32
    %1 = arith.extui %0 : i1 to i32
    %c0_i32_0 = arith.constant 0 : i32
    %2 = arith.cmpi ne, %1, %c0_i32_0 : i32
    scf.if %2 {
      %c0_126 = arith.constant 0 : index
      %c0_127 = arith.constant 0 : index
      %411 = vector.load %arg1[%c0_126, %c0_127] : memref<16x32xf32, #tpu.memory_space<vmem>>, vector<16x32xf32>
      %c0_128 = arith.constant 0 : index
      %c0_129 = arith.constant 0 : index
      %412 = vector.load %arg15[%c0_128, %c0_129] : memref<16x32xf32, #tpu.memory_space<vmem>>, vector<16x32xf32>
      tpu.vector_store %arg15[%c0_128, %c0_129], %411 {strides = array<i32>} : memref<16x32xf32, #tpu.memory_space<vmem>>, vector<16x32xf32>,
    } else {
    }
    %c0 = arith.constant 0 : index
    %c0_1 = arith.constant 0 : index
    %3 = vector.load %arg15[%c0, %c0_1] : memref<16x32xf32, #tpu.memory_space<vmem>>, vector<16x32xf32>
    %c0_2 = arith.constant 0 : index
    %c0_3 = arith.constant 0 : index
    %c0_4 = arith.constant 0 : index
    %4 = vector.load %arg2[%c0_2, %c0_3, %c0_4] : memref<1x32x96xf32, #tpu.memory_space<vmem>>, vector<1x32x96xf32>
    %5 = vector.shape_cast %4 : vector<1x32x96xf32> to vector<32x96xf32>
    %cst = arith.constant dense<0.000000e+00> : vector<16x96xf32>
    %6 = tpu.matmul %3, %5, %cst {dimension_numbers = #tpu.dot_dimension_numbers<[1], [0], [0], [1], [0, 0, 1, 1], [], []>} : vector<16x32xf32>, vector<32x96xf32>, vector<16x96xf32> -> vector<16x96xf32>
    %c0_5 = arith.constant 0 : index
    %c0_6 = arith.constant 0 : index
    %c0_7 = arith.constant 0 : index
    %7 = vector.load %arg3[%c0_5, %c0_6, %c0_7] : memref<1x1x96xf32, #tpu.memory_space<vmem>>, vector<1x1x96xf32>
    %8 = vector.shape_cast %7 : vector<1x1x96xf32> to vector<1x96xf32>
    %9 = vector.broadcast %8 : vector<1x96xf32> to vector<16x96xf32>
    %10 = arith.addf %6, %9 : vector<16x96xf32>
    %11 = vector.extract_strided_slice %10 {offsets = [0, 0], sizes = [8, 8], strides = [1, 1]} : vector<16x96xf32> to vector<8x8xf32>
    %12 = vector.extract_strided_slice %10 {offsets = [0, 32], sizes = [8, 8], strides = [1, 1]} : vector<16x96xf32> to vector<8x8xf32>
    %13 = arith.mulf %11, %12 : vector<8x8xf32>
    %cst_8 = arith.constant dense<0.000000e+00> : vector<8xf32>
    %14 = vector.multi_reduction <add>, %13, %cst_8 [1] : vector<8x8xf32> to vector<8xf32>
    %15 = vector.shape_cast %14 : vector<8xf32> to vector<8x1xf32>
    %cst_9 = arith.constant 0.353553385 : f32
    %16 = vector.broadcast %cst_9 : f32 to vector<8x1xf32>
    %17 = arith.mulf %15, %16 : vector<8x1xf32>
    %18 = vector.extract_strided_slice %10 {offsets = [8, 32], sizes = [8, 8], strides = [1, 1]} : vector<16x96xf32> to vector<8x8xf32>
    %19 = arith.mulf %11, %18 : vector<8x8xf32>
    %cst_10 = arith.constant dense<0.000000e+00> : vector<8xf32>
    %20 = vector.multi_reduction <add>, %19, %cst_10 [1] : vector<8x8xf32> to vector<8xf32>
    %21 = vector.shape_cast %20 : vector<8xf32> to vector<8x1xf32>
    %cst_11 = arith.constant 0.353553385 : f32
    %22 = vector.broadcast %cst_11 : f32 to vector<8x1xf32>
    %23 = arith.mulf %21, %22 : vector<8x1xf32>
    %24 = tpu.concatenate %17, %23 in 1 : vector<8x1xf32>, vector<8x1xf32> -> vector<8x2xf32>
    %cst_12 = arith.constant dense<0xFF800000> : vector<8xf32>
    %25 = vector.multi_reduction <maximumf>, %24, %cst_12 [1] : vector<8x2xf32> to vector<8xf32>
    %26 = vector.shape_cast %25 : vector<8xf32> to vector<8x1xf32>
    %27 = vector.broadcast %26 : vector<8x1xf32> to vector<8x2xf32>
    %28 = arith.subf %24, %27 : vector<8x2xf32>
    %29 = math.exp %28 : vector<8x2xf32>
    %cst_13 = arith.constant dense<0.000000e+00> : vector<8xf32>
    %30 = vector.multi_reduction <add>, %29, %cst_13 [1] : vector<8x2xf32> to vector<8xf32>
    %31 = vector.shape_cast %30 : vector<8xf32> to vector<8x1xf32>
    %32 = tpu.reciprocal %31 {approx = true} : vector<8x1xf32> -> vector<8x1xf32>
    %33 = vector.broadcast %32 : vector<8x1xf32> to vector<8x2xf32>
    %34 = arith.mulf %29, %33 : vector<8x2xf32>
    %cst_14 = arith.constant 0.000000e+00 : f32
    %35 = vector.broadcast %cst_14 : f32 to vector<8x8xf32>
    %36 = vector.extract_strided_slice %10 {offsets = [0, 64], sizes = [8, 8], strides = [1, 1]} : vector<16x96xf32> to vector<8x8xf32>
    %37 = vector.extract_strided_slice %34 {offsets = [0, 0], sizes = [8, 1], strides = [1, 1]} : vector<8x2xf32> to vector<8x1xf32>
    %38 = vector.broadcast %37 : vector<8x1xf32> to vector<8x8xf32>
    %39 = arith.mulf %38, %36 : vector<8x8xf32>
    %40 = arith.addf %35, %39 : vector<8x8xf32>
    %41 = vector.extract_strided_slice %10 {offsets = [8, 64], sizes = [8, 8], strides = [1, 1]} : vector<16x96xf32> to vector<8x8xf32>
    %42 = vector.extract_strided_slice %34 {offsets = [0, 1], sizes = [8, 1], strides = [1, 1]} : vector<8x2xf32> to vector<8x1xf32>
    %43 = vector.broadcast %42 : vector<8x1xf32> to vector<8x8xf32>
    %44 = arith.mulf %43, %41 : vector<8x8xf32>
    %45 = arith.addf %40, %44 : vector<8x8xf32>
    %46 = vector.extract_strided_slice %10 {offsets = [0, 8], sizes = [8, 8], strides = [1, 1]} : vector<16x96xf32> to vector<8x8xf32>
    %47 = vector.extract_strided_slice %10 {offsets = [0, 40], sizes = [8, 8], strides = [1, 1]} : vector<16x96xf32> to vector<8x8xf32>
    %48 = arith.mulf %46, %47 : vector<8x8xf32>
    %cst_15 = arith.constant dense<0.000000e+00> : vector<8xf32>
    %49 = vector.multi_reduction <add>, %48, %cst_15 [1] : vector<8x8xf32> to vector<8xf32>
    %50 = vector.shape_cast %49 : vector<8xf32> to vector<8x1xf32>
    %cst_16 = arith.constant 0.353553385 : f32
    %51 = vector.broadcast %cst_16 : f32 to vector<8x1xf32>
    %52 = arith.mulf %50, %51 : vector<8x1xf32>
    %53 = vector.extract_strided_slice %10 {offsets = [8, 40], sizes = [8, 8], strides = [1, 1]} : vector<16x96xf32> to vector<8x8xf32>
    %54 = arith.mulf %46, %53 : vector<8x8xf32>
    %cst_17 = arith.constant dense<0.000000e+00> : vector<8xf32>
    %55 = vector.multi_reduction <add>, %54, %cst_17 [1] : vector<8x8xf32> to vector<8xf32>
    %56 = vector.shape_cast %55 : vector<8xf32> to vector<8x1xf32>
    %cst_18 = arith.constant 0.353553385 : f32
    %57 = vector.broadcast %cst_18 : f32 to vector<8x1xf32>
    %58 = arith.mulf %56, %57 : vector<8x1xf32>
    %59 = tpu.concatenate %52, %58 in 1 : vector<8x1xf32>, vector<8x1xf32> -> vector<8x2xf32>
    %cst_19 = arith.constant dense<0xFF800000> : vector<8xf32>
    %60 = vector.multi_reduction <maximumf>, %59, %cst_19 [1] : vector<8x2xf32> to vector<8xf32>
    %61 = vector.shape_cast %60 : vector<8xf32> to vector<8x1xf32>
    %62 = vector.broadcast %61 : vector<8x1xf32> to vector<8x2xf32>
    %63 = arith.subf %59, %62 : vector<8x2xf32>
    %64 = math.exp %63 : vector<8x2xf32>
    %cst_20 = arith.constant dense<0.000000e+00> : vector<8xf32>
    %65 = vector.multi_reduction <add>, %64, %cst_20 [1] : vector<8x2xf32> to vector<8xf32>
    %66 = vector.shape_cast %65 : vector<8xf32> to vector<8x1xf32>
    %67 = tpu.reciprocal %66 {approx = true} : vector<8x1xf32> -> vector<8x1xf32>
    %68 = vector.broadcast %67 : vector<8x1xf32> to vector<8x2xf32>
    %69 = arith.mulf %64, %68 : vector<8x2xf32>
    %cst_21 = arith.constant 0.000000e+00 : f32
    %70 = vector.broadcast %cst_21 : f32 to vector<8x8xf32>
    %71 = vector.extract_strided_slice %10 {offsets = [0, 72], sizes = [8, 8], strides = [1, 1]} : vector<16x96xf32> to vector<8x8xf32>
    %72 = vector.extract_strided_slice %69 {offsets = [0, 0], sizes = [8, 1], strides = [1, 1]} : vector<8x2xf32> to vector<8x1xf32>
    %73 = vector.broadcast %72 : vector<8x1xf32> to vector<8x8xf32>
    %74 = arith.mulf %73, %71 : vector<8x8xf32>
    %75 = arith.addf %70, %74 : vector<8x8xf32>
    %76 = vector.extract_strided_slice %10 {offsets = [8, 72], sizes = [8, 8], strides = [1, 1]} : vector<16x96xf32> to vector<8x8xf32>
    %77 = vector.extract_strided_slice %69 {offsets = [0, 1], sizes = [8, 1], strides = [1, 1]} : vector<8x2xf32> to vector<8x1xf32>
    %78 = vector.broadcast %77 : vector<8x1xf32> to vector<8x8xf32>
    %79 = arith.mulf %78, %76 : vector<8x8xf32>
    %80 = arith.addf %75, %79 : vector<8x8xf32>
    %81 = vector.extract_strided_slice %10 {offsets = [0, 16], sizes = [8, 8], strides = [1, 1]} : vector<16x96xf32> to vector<8x8xf32>
    %82 = vector.extract_strided_slice %10 {offsets = [0, 48], sizes = [8, 8], strides = [1, 1]} : vector<16x96xf32> to vector<8x8xf32>
    %83 = arith.mulf %81, %82 : vector<8x8xf32>
    %cst_22 = arith.constant dense<0.000000e+00> : vector<8xf32>
    %84 = vector.multi_reduction <add>, %83, %cst_22 [1] : vector<8x8xf32> to vector<8xf32>
    %85 = vector.shape_cast %84 : vector<8xf32> to vector<8x1xf32>
    %cst_23 = arith.constant 0.353553385 : f32
    %86 = vector.broadcast %cst_23 : f32 to vector<8x1xf32>
    %87 = arith.mulf %85, %86 : vector<8x1xf32>
    %88 = vector.extract_strided_slice %10 {offsets = [8, 48], sizes = [8, 8], strides = [1, 1]} : vector<16x96xf32> to vector<8x8xf32>
    %89 = arith.mulf %81, %88 : vector<8x8xf32>
    %cst_24 = arith.constant dense<0.000000e+00> : vector<8xf32>
    %90 = vector.multi_reduction <add>, %89, %cst_24 [1] : vector<8x8xf32> to vector<8xf32>
    %91 = vector.shape_cast %90 : vector<8xf32> to vector<8x1xf32>
    %cst_25 = arith.constant 0.353553385 : f32
    %92 = vector.broadcast %cst_25 : f32 to vector<8x1xf32>
    %93 = arith.mulf %91, %92 : vector<8x1xf32>
    %94 = tpu.concatenate %87, %93 in 1 : vector<8x1xf32>, vector<8x1xf32> -> vector<8x2xf32>
    %cst_26 = arith.constant dense<0xFF800000> : vector<8xf32>
    %95 = vector.multi_reduction <maximumf>, %94, %cst_26 [1] : vector<8x2xf32> to vector<8xf32>
    %96 = vector.shape_cast %95 : vector<8xf32> to vector<8x1xf32>
    %97 = vector.broadcast %96 : vector<8x1xf32> to vector<8x2xf32>
    %98 = arith.subf %94, %97 : vector<8x2xf32>
    %99 = math.exp %98 : vector<8x2xf32>
    %cst_27 = arith.constant dense<0.000000e+00> : vector<8xf32>
    %100 = vector.multi_reduction <add>, %99, %cst_27 [1] : vector<8x2xf32> to vector<8xf32>
    %101 = vector.shape_cast %100 : vector<8xf32> to vector<8x1xf32>
    %102 = tpu.reciprocal %101 {approx = true} : vector<8x1xf32> -> vector<8x1xf32>
    %103 = vector.broadcast %102 : vector<8x1xf32> to vector<8x2xf32>
    %104 = arith.mulf %99, %103 : vector<8x2xf32>
    %cst_28 = arith.constant 0.000000e+00 : f32
    %105 = vector.broadcast %cst_28 : f32 to vector<8x8xf32>
    %106 = vector.extract_strided_slice %10 {offsets = [0, 80], sizes = [8, 8], strides = [1, 1]} : vector<16x96xf32> to vector<8x8xf32>
    %107 = vector.extract_strided_slice %104 {offsets = [0, 0], sizes = [8, 1], strides = [1, 1]} : vector<8x2xf32> to vector<8x1xf32>
    %108 = vector.broadcast %107 : vector<8x1xf32> to vector<8x8xf32>
    %109 = arith.mulf %108, %106 : vector<8x8xf32>
    %110 = arith.addf %105, %109 : vector<8x8xf32>
    %111 = vector.extract_strided_slice %10 {offsets = [8, 80], sizes = [8, 8], strides = [1, 1]} : vector<16x96xf32> to vector<8x8xf32>
    %112 = vector.extract_strided_slice %104 {offsets = [0, 1], sizes = [8, 1], strides = [1, 1]} : vector<8x2xf32> to vector<8x1xf32>
    %113 = vector.broadcast %112 : vector<8x1xf32> to vector<8x8xf32>
    %114 = arith.mulf %113, %111 : vector<8x8xf32>
    %115 = arith.addf %110, %114 : vector<8x8xf32>
    %116 = vector.extract_strided_slice %10 {offsets = [0, 24], sizes = [8, 8], strides = [1, 1]} : vector<16x96xf32> to vector<8x8xf32>
    %117 = vector.extract_strided_slice %10 {offsets = [0, 56], sizes = [8, 8], strides = [1, 1]} : vector<16x96xf32> to vector<8x8xf32>
    %118 = arith.mulf %116, %117 : vector<8x8xf32>
    %cst_29 = arith.constant dense<0.000000e+00> : vector<8xf32>
    %119 = vector.multi_reduction <add>, %118, %cst_29 [1] : vector<8x8xf32> to vector<8xf32>
    %120 = vector.shape_cast %119 : vector<8xf32> to vector<8x1xf32>
    %cst_30 = arith.constant 0.353553385 : f32
    %121 = vector.broadcast %cst_30 : f32 to vector<8x1xf32>
    %122 = arith.mulf %120, %121 : vector<8x1xf32>
    %123 = vector.extract_strided_slice %10 {offsets = [8, 56], sizes = [8, 8], strides = [1, 1]} : vector<16x96xf32> to vector<8x8xf32>
    %124 = arith.mulf %116, %123 : vector<8x8xf32>
    %cst_31 = arith.constant dense<0.000000e+00> : vector<8xf32>
    %125 = vector.multi_reduction <add>, %124, %cst_31 [1] : vector<8x8xf32> to vector<8xf32>
    %126 = vector.shape_cast %125 : vector<8xf32> to vector<8x1xf32>
    %cst_32 = arith.constant 0.353553385 : f32
    %127 = vector.broadcast %cst_32 : f32 to vector<8x1xf32>
    %128 = arith.mulf %126, %127 : vector<8x1xf32>
    %129 = tpu.concatenate %122, %128 in 1 : vector<8x1xf32>, vector<8x1xf32> -> vector<8x2xf32>
    %cst_33 = arith.constant dense<0xFF800000> : vector<8xf32>
    %130 = vector.multi_reduction <maximumf>, %129, %cst_33 [1] : vector<8x2xf32> to vector<8xf32>
    %131 = vector.shape_cast %130 : vector<8xf32> to vector<8x1xf32>
    %132 = vector.broadcast %131 : vector<8x1xf32> to vector<8x2xf32>
    %133 = arith.subf %129, %132 : vector<8x2xf32>
    %134 = math.exp %133 : vector<8x2xf32>
    %cst_34 = arith.constant dense<0.000000e+00> : vector<8xf32>
    %135 = vector.multi_reduction <add>, %134, %cst_34 [1] : vector<8x2xf32> to vector<8xf32>
    %136 = vector.shape_cast %135 : vector<8xf32> to vector<8x1xf32>
    %137 = tpu.reciprocal %136 {approx = true} : vector<8x1xf32> -> vector<8x1xf32>
    %138 = vector.broadcast %137 : vector<8x1xf32> to vector<8x2xf32>
    %139 = arith.mulf %134, %138 : vector<8x2xf32>
    %cst_35 = arith.constant 0.000000e+00 : f32
    %140 = vector.broadcast %cst_35 : f32 to vector<8x8xf32>
    %141 = vector.extract_strided_slice %10 {offsets = [0, 88], sizes = [8, 8], strides = [1, 1]} : vector<16x96xf32> to vector<8x8xf32>
    %142 = vector.extract_strided_slice %139 {offsets = [0, 0], sizes = [8, 1], strides = [1, 1]} : vector<8x2xf32> to vector<8x1xf32>
    %143 = vector.broadcast %142 : vector<8x1xf32> to vector<8x8xf32>
    %144 = arith.mulf %143, %141 : vector<8x8xf32>
    %145 = arith.addf %140, %144 : vector<8x8xf32>
    %146 = vector.extract_strided_slice %10 {offsets = [8, 88], sizes = [8, 8], strides = [1, 1]} : vector<16x96xf32> to vector<8x8xf32>
    %147 = vector.extract_strided_slice %139 {offsets = [0, 1], sizes = [8, 1], strides = [1, 1]} : vector<8x2xf32> to vector<8x1xf32>
    %148 = vector.broadcast %147 : vector<8x1xf32> to vector<8x8xf32>
    %149 = arith.mulf %148, %146 : vector<8x8xf32>
    %150 = arith.addf %145, %149 : vector<8x8xf32>
    %151 = tpu.concatenate %45, %80, %115, %150 in 1 : vector<8x8xf32>, vector<8x8xf32>, vector<8x8xf32>, vector<8x8xf32> -> vector<8x32xf32>
    %152 = vector.extract_strided_slice %10 {offsets = [8, 0], sizes = [8, 8], strides = [1, 1]} : vector<16x96xf32> to vector<8x8xf32>
    %153 = vector.extract_strided_slice %10 {offsets = [0, 32], sizes = [8, 8], strides = [1, 1]} : vector<16x96xf32> to vector<8x8xf32>
    %154 = arith.mulf %152, %153 : vector<8x8xf32>
    %cst_36 = arith.constant dense<0.000000e+00> : vector<8xf32>
    %155 = vector.multi_reduction <add>, %154, %cst_36 [1] : vector<8x8xf32> to vector<8xf32>
    %156 = vector.shape_cast %155 : vector<8xf32> to vector<8x1xf32>
    %cst_37 = arith.constant 0.353553385 : f32
    %157 = vector.broadcast %cst_37 : f32 to vector<8x1xf32>
    %158 = arith.mulf %156, %157 : vector<8x1xf32>
    %159 = vector.extract_strided_slice %10 {offsets = [8, 32], sizes = [8, 8], strides = [1, 1]} : vector<16x96xf32> to vector<8x8xf32>
    %160 = arith.mulf %152, %159 : vector<8x8xf32>
    %cst_38 = arith.constant dense<0.000000e+00> : vector<8xf32>
    %161 = vector.multi_reduction <add>, %160, %cst_38 [1] : vector<8x8xf32> to vector<8xf32>
    %162 = vector.shape_cast %161 : vector<8xf32> to vector<8x1xf32>
    %cst_39 = arith.constant 0.353553385 : f32
    %163 = vector.broadcast %cst_39 : f32 to vector<8x1xf32>
    %164 = arith.mulf %162, %163 : vector<8x1xf32>
    %165 = tpu.concatenate %158, %164 in 1 : vector<8x1xf32>, vector<8x1xf32> -> vector<8x2xf32>
    %cst_40 = arith.constant dense<0xFF800000> : vector<8xf32>
    %166 = vector.multi_reduction <maximumf>, %165, %cst_40 [1] : vector<8x2xf32> to vector<8xf32>
    %167 = vector.shape_cast %166 : vector<8xf32> to vector<8x1xf32>
    %168 = vector.broadcast %167 : vector<8x1xf32> to vector<8x2xf32>
    %169 = arith.subf %165, %168 : vector<8x2xf32>
    %170 = math.exp %169 : vector<8x2xf32>
    %cst_41 = arith.constant dense<0.000000e+00> : vector<8xf32>
    %171 = vector.multi_reduction <add>, %170, %cst_41 [1] : vector<8x2xf32> to vector<8xf32>
    %172 = vector.shape_cast %171 : vector<8xf32> to vector<8x1xf32>
    %173 = tpu.reciprocal %172 {approx = true} : vector<8x1xf32> -> vector<8x1xf32>
    %174 = vector.broadcast %173 : vector<8x1xf32> to vector<8x2xf32>
    %175 = arith.mulf %170, %174 : vector<8x2xf32>
    %cst_42 = arith.constant 0.000000e+00 : f32
    %176 = vector.broadcast %cst_42 : f32 to vector<8x8xf32>
    %177 = vector.extract_strided_slice %10 {offsets = [0, 64], sizes = [8, 8], strides = [1, 1]} : vector<16x96xf32> to vector<8x8xf32>
    %178 = vector.extract_strided_slice %175 {offsets = [0, 0], sizes = [8, 1], strides = [1, 1]} : vector<8x2xf32> to vector<8x1xf32>
    %179 = vector.broadcast %178 : vector<8x1xf32> to vector<8x8xf32>
    %180 = arith.mulf %179, %177 : vector<8x8xf32>
    %181 = arith.addf %176, %180 : vector<8x8xf32>
    %182 = vector.extract_strided_slice %10 {offsets = [8, 64], sizes = [8, 8], strides = [1, 1]} : vector<16x96xf32> to vector<8x8xf32>
    %183 = vector.extract_strided_slice %175 {offsets = [0, 1], sizes = [8, 1], strides = [1, 1]} : vector<8x2xf32> to vector<8x1xf32>
    %184 = vector.broadcast %183 : vector<8x1xf32> to vector<8x8xf32>
    %185 = arith.mulf %184, %182 : vector<8x8xf32>
    %186 = arith.addf %181, %185 : vector<8x8xf32>
    %187 = vector.extract_strided_slice %10 {offsets = [8, 8], sizes = [8, 8], strides = [1, 1]} : vector<16x96xf32> to vector<8x8xf32>
    %188 = vector.extract_strided_slice %10 {offsets = [0, 40], sizes = [8, 8], strides = [1, 1]} : vector<16x96xf32> to vector<8x8xf32>
    %189 = arith.mulf %187, %188 : vector<8x8xf32>
    %cst_43 = arith.constant dense<0.000000e+00> : vector<8xf32>
    %190 = vector.multi_reduction <add>, %189, %cst_43 [1] : vector<8x8xf32> to vector<8xf32>
    %191 = vector.shape_cast %190 : vector<8xf32> to vector<8x1xf32>
    %cst_44 = arith.constant 0.353553385 : f32
    %192 = vector.broadcast %cst_44 : f32 to vector<8x1xf32>
    %193 = arith.mulf %191, %192 : vector<8x1xf32>
    %194 = vector.extract_strided_slice %10 {offsets = [8, 40], sizes = [8, 8], strides = [1, 1]} : vector<16x96xf32> to vector<8x8xf32>
    %195 = arith.mulf %187, %194 : vector<8x8xf32>
    %cst_45 = arith.constant dense<0.000000e+00> : vector<8xf32>
    %196 = vector.multi_reduction <add>, %195, %cst_45 [1] : vector<8x8xf32> to vector<8xf32>
    %197 = vector.shape_cast %196 : vector<8xf32> to vector<8x1xf32>
    %cst_46 = arith.constant 0.353553385 : f32
    %198 = vector.broadcast %cst_46 : f32 to vector<8x1xf32>
    %199 = arith.mulf %197, %198 : vector<8x1xf32>
    %200 = tpu.concatenate %193, %199 in 1 : vector<8x1xf32>, vector<8x1xf32> -> vector<8x2xf32>
    %cst_47 = arith.constant dense<0xFF800000> : vector<8xf32>
    %201 = vector.multi_reduction <maximumf>, %200, %cst_47 [1] : vector<8x2xf32> to vector<8xf32>
    %202 = vector.shape_cast %201 : vector<8xf32> to vector<8x1xf32>
    %203 = vector.broadcast %202 : vector<8x1xf32> to vector<8x2xf32>
    %204 = arith.subf %200, %203 : vector<8x2xf32>
    %205 = math.exp %204 : vector<8x2xf32>
    %cst_48 = arith.constant dense<0.000000e+00> : vector<8xf32>
    %206 = vector.multi_reduction <add>, %205, %cst_48 [1] : vector<8x2xf32> to vector<8xf32>
    %207 = vector.shape_cast %206 : vector<8xf32> to vector<8x1xf32>
    %208 = tpu.reciprocal %207 {approx = true} : vector<8x1xf32> -> vector<8x1xf32>
    %209 = vector.broadcast %208 : vector<8x1xf32> to vector<8x2xf32>
    %210 = arith.mulf %205, %209 : vector<8x2xf32>
    %cst_49 = arith.constant 0.000000e+00 : f32
    %211 = vector.broadcast %cst_49 : f32 to vector<8x8xf32>
    %212 = vector.extract_strided_slice %10 {offsets = [0, 72], sizes = [8, 8], strides = [1, 1]} : vector<16x96xf32> to vector<8x8xf32>
    %213 = vector.extract_strided_slice %210 {offsets = [0, 0], sizes = [8, 1], strides = [1, 1]} : vector<8x2xf32> to vector<8x1xf32>
    %214 = vector.broadcast %213 : vector<8x1xf32> to vector<8x8xf32>
    %215 = arith.mulf %214, %212 : vector<8x8xf32>
    %216 = arith.addf %211, %215 : vector<8x8xf32>
    %217 = vector.extract_strided_slice %10 {offsets = [8, 72], sizes = [8, 8], strides = [1, 1]} : vector<16x96xf32> to vector<8x8xf32>
    %218 = vector.extract_strided_slice %210 {offsets = [0, 1], sizes = [8, 1], strides = [1, 1]} : vector<8x2xf32> to vector<8x1xf32>
    %219 = vector.broadcast %218 : vector<8x1xf32> to vector<8x8xf32>
    %220 = arith.mulf %219, %217 : vector<8x8xf32>
    %221 = arith.addf %216, %220 : vector<8x8xf32>
    %222 = vector.extract_strided_slice %10 {offsets = [8, 16], sizes = [8, 8], strides = [1, 1]} : vector<16x96xf32> to vector<8x8xf32>
    %223 = vector.extract_strided_slice %10 {offsets = [0, 48], sizes = [8, 8], strides = [1, 1]} : vector<16x96xf32> to vector<8x8xf32>
    %224 = arith.mulf %222, %223 : vector<8x8xf32>
    %cst_50 = arith.constant dense<0.000000e+00> : vector<8xf32>
    %225 = vector.multi_reduction <add>, %224, %cst_50 [1] : vector<8x8xf32> to vector<8xf32>
    %226 = vector.shape_cast %225 : vector<8xf32> to vector<8x1xf32>
    %cst_51 = arith.constant 0.353553385 : f32
    %227 = vector.broadcast %cst_51 : f32 to vector<8x1xf32>
    %228 = arith.mulf %226, %227 : vector<8x1xf32>
    %229 = vector.extract_strided_slice %10 {offsets = [8, 48], sizes = [8, 8], strides = [1, 1]} : vector<16x96xf32> to vector<8x8xf32>
    %230 = arith.mulf %222, %229 : vector<8x8xf32>
    %cst_52 = arith.constant dense<0.000000e+00> : vector<8xf32>
    %231 = vector.multi_reduction <add>, %230, %cst_52 [1] : vector<8x8xf32> to vector<8xf32>
    %232 = vector.shape_cast %231 : vector<8xf32> to vector<8x1xf32>
    %cst_53 = arith.constant 0.353553385 : f32
    %233 = vector.broadcast %cst_53 : f32 to vector<8x1xf32>
    %234 = arith.mulf %232, %233 : vector<8x1xf32>
    %235 = tpu.concatenate %228, %234 in 1 : vector<8x1xf32>, vector<8x1xf32> -> vector<8x2xf32>
    %cst_54 = arith.constant dense<0xFF800000> : vector<8xf32>
    %236 = vector.multi_reduction <maximumf>, %235, %cst_54 [1] : vector<8x2xf32> to vector<8xf32>
    %237 = vector.shape_cast %236 : vector<8xf32> to vector<8x1xf32>
    %238 = vector.broadcast %237 : vector<8x1xf32> to vector<8x2xf32>
    %239 = arith.subf %235, %238 : vector<8x2xf32>
    %240 = math.exp %239 : vector<8x2xf32>
    %cst_55 = arith.constant dense<0.000000e+00> : vector<8xf32>
    %241 = vector.multi_reduction <add>, %240, %cst_55 [1] : vector<8x2xf32> to vector<8xf32>
    %242 = vector.shape_cast %241 : vector<8xf32> to vector<8x1xf32>
    %243 = tpu.reciprocal %242 {approx = true} : vector<8x1xf32> -> vector<8x1xf32>
    %244 = vector.broadcast %243 : vector<8x1xf32> to vector<8x2xf32>
    %245 = arith.mulf %240, %244 : vector<8x2xf32>
    %cst_56 = arith.constant 0.000000e+00 : f32
    %246 = vector.broadcast %cst_56 : f32 to vector<8x8xf32>
    %247 = vector.extract_strided_slice %10 {offsets = [0, 80], sizes = [8, 8], strides = [1, 1]} : vector<16x96xf32> to vector<8x8xf32>
    %248 = vector.extract_strided_slice %245 {offsets = [0, 0], sizes = [8, 1], strides = [1, 1]} : vector<8x2xf32> to vector<8x1xf32>
    %249 = vector.broadcast %248 : vector<8x1xf32> to vector<8x8xf32>
    %250 = arith.mulf %249, %247 : vector<8x8xf32>
    %251 = arith.addf %246, %250 : vector<8x8xf32>
    %252 = vector.extract_strided_slice %10 {offsets = [8, 80], sizes = [8, 8], strides = [1, 1]} : vector<16x96xf32> to vector<8x8xf32>
    %253 = vector.extract_strided_slice %245 {offsets = [0, 1], sizes = [8, 1], strides = [1, 1]} : vector<8x2xf32> to vector<8x1xf32>
    %254 = vector.broadcast %253 : vector<8x1xf32> to vector<8x8xf32>
    %255 = arith.mulf %254, %252 : vector<8x8xf32>
    %256 = arith.addf %251, %255 : vector<8x8xf32>
    %257 = vector.extract_strided_slice %10 {offsets = [8, 24], sizes = [8, 8], strides = [1, 1]} : vector<16x96xf32> to vector<8x8xf32>
    %258 = vector.extract_strided_slice %10 {offsets = [0, 56], sizes = [8, 8], strides = [1, 1]} : vector<16x96xf32> to vector<8x8xf32>
    %259 = arith.mulf %257, %258 : vector<8x8xf32>
    %cst_57 = arith.constant dense<0.000000e+00> : vector<8xf32>
    %260 = vector.multi_reduction <add>, %259, %cst_57 [1] : vector<8x8xf32> to vector<8xf32>
    %261 = vector.shape_cast %260 : vector<8xf32> to vector<8x1xf32>
    %cst_58 = arith.constant 0.353553385 : f32
    %262 = vector.broadcast %cst_58 : f32 to vector<8x1xf32>
    %263 = arith.mulf %261, %262 : vector<8x1xf32>
    %264 = vector.extract_strided_slice %10 {offsets = [8, 56], sizes = [8, 8], strides = [1, 1]} : vector<16x96xf32> to vector<8x8xf32>
    %265 = arith.mulf %257, %264 : vector<8x8xf32>
    %cst_59 = arith.constant dense<0.000000e+00> : vector<8xf32>
    %266 = vector.multi_reduction <add>, %265, %cst_59 [1] : vector<8x8xf32> to vector<8xf32>
    %267 = vector.shape_cast %266 : vector<8xf32> to vector<8x1xf32>
    %cst_60 = arith.constant 0.353553385 : f32
    %268 = vector.broadcast %cst_60 : f32 to vector<8x1xf32>
    %269 = arith.mulf %267, %268 : vector<8x1xf32>
    %270 = tpu.concatenate %263, %269 in 1 : vector<8x1xf32>, vector<8x1xf32> -> vector<8x2xf32>
    %cst_61 = arith.constant dense<0xFF800000> : vector<8xf32>
    %271 = vector.multi_reduction <maximumf>, %270, %cst_61 [1] : vector<8x2xf32> to vector<8xf32>
    %272 = vector.shape_cast %271 : vector<8xf32> to vector<8x1xf32>
    %273 = vector.broadcast %272 : vector<8x1xf32> to vector<8x2xf32>
    %274 = arith.subf %270, %273 : vector<8x2xf32>
    %275 = math.exp %274 : vector<8x2xf32>
    %cst_62 = arith.constant dense<0.000000e+00> : vector<8xf32>
    %276 = vector.multi_reduction <add>, %275, %cst_62 [1] : vector<8x2xf32> to vector<8xf32>
    %277 = vector.shape_cast %276 : vector<8xf32> to vector<8x1xf32>
    %278 = tpu.reciprocal %277 {approx = true} : vector<8x1xf32> -> vector<8x1xf32>
    %279 = vector.broadcast %278 : vector<8x1xf32> to vector<8x2xf32>
    %280 = arith.mulf %275, %279 : vector<8x2xf32>
    %cst_63 = arith.constant 0.000000e+00 : f32
    %281 = vector.broadcast %cst_63 : f32 to vector<8x8xf32>
    %282 = vector.extract_strided_slice %10 {offsets = [0, 88], sizes = [8, 8], strides = [1, 1]} : vector<16x96xf32> to vector<8x8xf32>
    %283 = vector.extract_strided_slice %280 {offsets = [0, 0], sizes = [8, 1], strides = [1, 1]} : vector<8x2xf32> to vector<8x1xf32>
    %284 = vector.broadcast %283 : vector<8x1xf32> to vector<8x8xf32>
    %285 = arith.mulf %284, %282 : vector<8x8xf32>
    %286 = arith.addf %281, %285 : vector<8x8xf32>
    %287 = vector.extract_strided_slice %10 {offsets = [8, 88], sizes = [8, 8], strides = [1, 1]} : vector<16x96xf32> to vector<8x8xf32>
    %288 = vector.extract_strided_slice %280 {offsets = [0, 1], sizes = [8, 1], strides = [1, 1]} : vector<8x2xf32> to vector<8x1xf32>
    %289 = vector.broadcast %288 : vector<8x1xf32> to vector<8x8xf32>
    %290 = arith.mulf %289, %287 : vector<8x8xf32>
    %291 = arith.addf %286, %290 : vector<8x8xf32>
    %292 = tpu.concatenate %186, %221, %256, %291 in 1 : vector<8x8xf32>, vector<8x8xf32>, vector<8x8xf32>, vector<8x8xf32> -> vector<8x32xf32>
    %293 = tpu.concatenate %151, %292 in 0 : vector<8x32xf32>, vector<8x32xf32> -> vector<16x32xf32>
    %c0_64 = arith.constant 0 : index
    %c0_65 = arith.constant 0 : index
    %c0_66 = arith.constant 0 : index
    %294 = vector.load %arg4[%c0_64, %c0_65, %c0_66] : memref<1x32x32xf32, #tpu.memory_space<vmem>>, vector<1x32x32xf32>
    %295 = vector.shape_cast %294 : vector<1x32x32xf32> to vector<32x32xf32>
    %cst_67 = arith.constant dense<0.000000e+00> : vector<16x32xf32>
    %296 = tpu.matmul %293, %295, %cst_67 {dimension_numbers = #tpu.dot_dimension_numbers<[1], [0], [0], [1], [0, 0, 1, 1], [], []>} : vector<16x32xf32>, vector<32x32xf32>, vector<16x32xf32> -> vector<16x32xf32>
    %c0_68 = arith.constant 0 : index
    %c0_69 = arith.constant 0 : index
    %c0_70 = arith.constant 0 : index
    %297 = vector.load %arg5[%c0_68, %c0_69, %c0_70] : memref<1x1x32xf32, #tpu.memory_space<vmem>>, vector<1x1x32xf32>
    %298 = vector.shape_cast %297 : vector<1x1x32xf32> to vector<1x32xf32>
    %299 = vector.broadcast %298 : vector<1x32xf32> to vector<16x32xf32>
    %300 = arith.addf %296, %299 : vector<16x32xf32>
    %301 = arith.addf %3, %300 : vector<16x32xf32>
    %c0_71 = arith.constant 0 : index
    %c0_72 = arith.constant 0 : index
    %c0_73 = arith.constant 0 : index
    %302 = vector.load %arg6[%c0_71, %c0_72, %c0_73] : memref<1x1x32xf32, #tpu.memory_space<vmem>>, vector<1x1x32xf32>
    %303 = vector.shape_cast %302 : vector<1x1x32xf32> to vector<1x32xf32>
    %c0_74 = arith.constant 0 : index
    %c0_75 = arith.constant 0 : index
    %c0_76 = arith.constant 0 : index
    %304 = vector.load %arg7[%c0_74, %c0_75, %c0_76] : memref<1x1x32xf32, #tpu.memory_space<vmem>>, vector<1x1x32xf32>
    %305 = vector.shape_cast %304 : vector<1x1x32xf32> to vector<1x32xf32>
    %cst_77 = arith.constant dense<0.000000e+00> : vector<16xf32>
    %306 = vector.multi_reduction <add>, %301, %cst_77 [1] : vector<16x32xf32> to vector<16xf32>
    %307 = vector.shape_cast %306 : vector<16xf32> to vector<16x1xf32>
    %cst_78 = arith.constant 3.200000e+01 : f32
    %308 = vector.broadcast %cst_78 : f32 to vector<16x1xf32>
    %309 = arith.divf %307, %308 : vector<16x1xf32>
    %310 = vector.broadcast %309 : vector<16x1xf32> to vector<16x32xf32>
    %311 = arith.subf %301, %310 : vector<16x32xf32>
    %312 = arith.mulf %311, %311 : vector<16x32xf32>
    %cst_79 = arith.constant dense<0.000000e+00> : vector<16xf32>
    %313 = vector.multi_reduction <add>, %312, %cst_79 [1] : vector<16x32xf32> to vector<16xf32>
    %314 = vector.shape_cast %313 : vector<16xf32> to vector<16x1xf32>
    %cst_80 = arith.constant 3.200000e+01 : f32
    %315 = vector.broadcast %cst_80 : f32 to vector<16x1xf32>
    %316 = arith.divf %314, %315 : vector<16x1xf32>
    %317 = vector.broadcast %309 : vector<16x1xf32> to vector<16x32xf32>
    %318 = arith.subf %301, %317 : vector<16x32xf32>
    %cst_81 = arith.constant 9.99999974E-6 : f32
    %319 = vector.broadcast %cst_81 : f32 to vector<16x1xf32>
    %320 = arith.addf %316, %319 : vector<16x1xf32>
    %321 = math.rsqrt %320 : vector<16x1xf32>
    %322 = vector.broadcast %321 : vector<16x1xf32> to vector<16x32xf32>
    %323 = arith.mulf %318, %322 : vector<16x32xf32>
    %324 = vector.broadcast %303 : vector<1x32xf32> to vector<16x32xf32>
    %325 = arith.mulf %323, %324 : vector<16x32xf32>
    %326 = vector.broadcast %305 : vector<1x32xf32> to vector<16x32xf32>
    %327 = arith.addf %325, %326 : vector<16x32xf32>
    %c0_82 = arith.constant 0 : index
    %c0_83 = arith.constant 0 : index
    %c0_84 = arith.constant 0 : index
    %328 = vector.load %arg8[%c0_82, %c0_83, %c0_84] : memref<1x32x128xf32, #tpu.memory_space<vmem>>, vector<1x32x128xf32>
    %329 = vector.shape_cast %328 : vector<1x32x128xf32> to vector<32x128xf32>
    %cst_85 = arith.constant dense<0.000000e+00> : vector<16x128xf32>
    %330 = tpu.matmul %327, %329, %cst_85 {dimension_numbers = #tpu.dot_dimension_numbers<[1], [0], [0], [1], [0, 0, 1, 1], [], []>} : vector<16x32xf32>, vector<32x128xf32>, vector<16x128xf32> -> vector<16x128xf32>
    %c0_86 = arith.constant 0 : index
    %c0_87 = arith.constant 0 : index
    %c0_88 = arith.constant 0 : index
    %331 = vector.load %arg9[%c0_86, %c0_87, %c0_88] : memref<1x1x128xf32, #tpu.memory_space<vmem>>, vector<1x1x128xf32>
    %332 = vector.shape_cast %331 : vector<1x1x128xf32> to vector<1x128xf32>
    %333 = vector.broadcast %332 : vector<1x128xf32> to vector<16x128xf32>
    %334 = arith.addf %330, %333 : vector<16x128xf32>
    %cst_89 = arith.constant 5.000000e-01 : f32
    %335 = vector.broadcast %cst_89 : f32 to vector<16x128xf32>
    %336 = arith.mulf %335, %334 : vector<16x128xf32>
    %cst_90 = arith.constant 0.707106769 : f32
    %337 = vector.broadcast %cst_90 : f32 to vector<16x128xf32>
    %338 = arith.mulf %334, %337 : vector<16x128xf32>
    %339 = math.absf %338 : vector<16x128xf32>
    %cst_91 = arith.constant 0.327591091 : f32
    %340 = vector.broadcast %cst_91 : f32 to vector<16x128xf32>
    %341 = arith.mulf %340, %339 : vector<16x128xf32>
    %cst_92 = arith.constant 1.000000e+00 : f32
    %342 = vector.broadcast %cst_92 : f32 to vector<16x128xf32>
    %343 = arith.addf %342, %341 : vector<16x128xf32>
    %cst_93 = arith.constant 1.000000e+00 : f32
    %344 = vector.broadcast %cst_93 : f32 to vector<16x128xf32>
    %345 = arith.divf %344, %343 : vector<16x128xf32>
    %cst_94 = arith.constant 1.06140542 : f32
    %346 = vector.broadcast %cst_94 : f32 to vector<16x128xf32>
    %347 = arith.mulf %346, %345 : vector<16x128xf32>
    %cst_95 = arith.constant -1.45315206 : f32
    %348 = vector.broadcast %cst_95 : f32 to vector<16x128xf32>
    %349 = arith.addf %347, %348 : vector<16x128xf32>
    %350 = arith.mulf %349, %345 : vector<16x128xf32>
    %cst_96 = arith.constant 1.42141378 : f32
    %351 = vector.broadcast %cst_96 : f32 to vector<16x128xf32>
    %352 = arith.addf %350, %351 : vector<16x128xf32>
    %353 = arith.mulf %352, %345 : vector<16x128xf32>
    %cst_97 = arith.constant -0.284496725 : f32
    %354 = vector.broadcast %cst_97 : f32 to vector<16x128xf32>
    %355 = arith.addf %353, %354 : vector<16x128xf32>
    %356 = arith.mulf %355, %345 : vector<16x128xf32>
    %cst_98 = arith.constant 0.254829586 : f32
    %357 = vector.broadcast %cst_98 : f32 to vector<16x128xf32>
    %358 = arith.addf %356, %357 : vector<16x128xf32>
    %359 = arith.mulf %358, %345 : vector<16x128xf32>
    %cst_99 = arith.constant 0.000000e+00 : f32
    %360 = vector.broadcast %cst_99 : f32 to vector<16x128xf32>
    %361 = arith.subf %360, %339 : vector<16x128xf32>
    %362 = arith.mulf %361, %339 : vector<16x128xf32>
    %363 = math.exp %362 : vector<16x128xf32>
    %364 = arith.mulf %359, %363 : vector<16x128xf32>
    %cst_100 = arith.constant 1.000000e+00 : f32
    %365 = vector.broadcast %cst_100 : f32 to vector<16x128xf32>
    %366 = arith.subf %365, %364 : vector<16x128xf32>
    %cst_101 = arith.constant 0.000000e+00 : f32
    %367 = vector.broadcast %cst_101 : f32 to vector<16x128xf32>
    %368 = arith.cmpf olt, %338, %367 : vector<16x128xf32>
    %cst_102 = arith.constant 0.000000e+00 : f32
    %369 = vector.broadcast %cst_102 : f32 to vector<16x128xf32>
    %370 = arith.subf %369, %366 : vector<16x128xf32>
    %371 = arith.select %368, %370, %366 : vector<16x128xi1>, vector<16x128xf32>
    %cst_103 = arith.constant 1.000000e+00 : f32
    %372 = vector.broadcast %cst_103 : f32 to vector<16x128xf32>
    %373 = arith.addf %372, %371 : vector<16x128xf32>
    %374 = arith.mulf %336, %373 : vector<16x128xf32>
    %c0_104 = arith.constant 0 : index
    %c0_105 = arith.constant 0 : index
    %c0_106 = arith.constant 0 : index
    %375 = vector.load %arg10[%c0_104, %c0_105, %c0_106] : memref<1x128x32xf32, #tpu.memory_space<vmem>>, vector<1x128x32xf32>
    %376 = vector.shape_cast %375 : vector<1x128x32xf32> to vector<128x32xf32>
    %cst_107 = arith.constant dense<0.000000e+00> : vector<16x32xf32>
    %377 = tpu.matmul %374, %376, %cst_107 {dimension_numbers = #tpu.dot_dimension_numbers<[1], [0], [0], [1], [0, 0, 1, 1], [], []>} : vector<16x128xf32>, vector<128x32xf32>, vector<16x32xf32> -> vector<16x32xf32>
    %c0_108 = arith.constant 0 : index
    %c0_109 = arith.constant 0 : index
    %c0_110 = arith.constant 0 : index
    %378 = vector.load %arg11[%c0_108, %c0_109, %c0_110] : memref<1x1x32xf32, #tpu.memory_space<vmem>>, vector<1x1x32xf32>
    %379 = vector.shape_cast %378 : vector<1x1x32xf32> to vector<1x32xf32>
    %380 = vector.broadcast %379 : vector<1x32xf32> to vector<16x32xf32>
    %381 = arith.addf %377, %380 : vector<16x32xf32>
    %382 = arith.addf %327, %381 : vector<16x32xf32>
    %c0_111 = arith.constant 0 : index
    %c0_112 = arith.constant 0 : index
    %c0_113 = arith.constant 0 : index
    %383 = vector.load %arg12[%c0_111, %c0_112, %c0_113] : memref<1x1x32xf32, #tpu.memory_space<vmem>>, vector<1x1x32xf32>
    %384 = vector.shape_cast %383 : vector<1x1x32xf32> to vector<1x32xf32>
    %c0_114 = arith.constant 0 : index
    %c0_115 = arith.constant 0 : index
    %c0_116 = arith.constant 0 : index
    %385 = vector.load %arg13[%c0_114, %c0_115, %c0_116] : memref<1x1x32xf32, #tpu.memory_space<vmem>>, vector<1x1x32xf32>
    %386 = vector.shape_cast %385 : vector<1x1x32xf32> to vector<1x32xf32>
    %cst_117 = arith.constant dense<0.000000e+00> : vector<16xf32>
    %387 = vector.multi_reduction <add>, %382, %cst_117 [1] : vector<16x32xf32> to vector<16xf32>
    %388 = vector.shape_cast %387 : vector<16xf32> to vector<16x1xf32>
    %cst_118 = arith.constant 3.200000e+01 : f32
    %389 = vector.broadcast %cst_118 : f32 to vector<16x1xf32>
    %390 = arith.divf %388, %389 : vector<16x1xf32>
    %391 = vector.broadcast %390 : vector<16x1xf32> to vector<16x32xf32>
    %392 = arith.subf %382, %391 : vector<16x32xf32>
    %393 = arith.mulf %392, %392 : vector<16x32xf32>
    %cst_119 = arith.constant dense<0.000000e+00> : vector<16xf32>
    %394 = vector.multi_reduction <add>, %393, %cst_119 [1] : vector<16x32xf32> to vector<16xf32>
    %395 = vector.shape_cast %394 : vector<16xf32> to vector<16x1xf32>
    %cst_120 = arith.constant 3.200000e+01 : f32
    %396 = vector.broadcast %cst_120 : f32 to vector<16x1xf32>
    %397 = arith.divf %395, %396 : vector<16x1xf32>
    %398 = vector.broadcast %390 : vector<16x1xf32> to vector<16x32xf32>
    %399 = arith.subf %382, %398 : vector<16x32xf32>
    %cst_121 = arith.constant 9.99999974E-6 : f32
    %400 = vector.broadcast %cst_121 : f32 to vector<16x1xf32>
    %401 = arith.addf %397, %400 : vector<16x1xf32>
    %402 = math.rsqrt %401 : vector<16x1xf32>
    %403 = vector.broadcast %402 : vector<16x1xf32> to vector<16x32xf32>
    %404 = arith.mulf %399, %403 : vector<16x32xf32>
    %405 = vector.broadcast %384 : vector<1x32xf32> to vector<16x32xf32>
    %406 = arith.mulf %404, %405 : vector<16x32xf32>
    %407 = vector.broadcast %386 : vector<1x32xf32> to vector<16x32xf32>
    %408 = arith.addf %406, %407 : vector<16x32xf32>
    %c0_122 = arith.constant 0 : index
    %c0_123 = arith.constant 0 : index
    %409 = vector.load %arg15[%c0_122, %c0_123] : memref<16x32xf32, #tpu.memory_space<vmem>>, vector<16x32xf32>
    tpu.vector_store %arg15[%c0_122, %c0_123], %408 {strides = array<i32>} : memref<16x32xf32, #tpu.memory_space<vmem>>, vector<16x32xf32>,
    %c0_124 = arith.constant 0 : index
    %c0_125 = arith.constant 0 : index
    %410 = vector.load %arg14[%c0_124, %c0_125] : memref<16x32xf32, #tpu.memory_space<vmem>>, vector<16x32xf32>
    tpu.vector_store %arg14[%c0_124, %c0_125], %408 {strides = array<i32>} : memref<16x32xf32, #tpu.memory_space<vmem>>, vector<16x32xf32>,
    return
  }
  func.func @transform_0(%arg0: i32) -> (i32, i32) {
    %c0_i32 = arith.constant 0 : i32
    %c0_i32_0 = arith.constant 0 : i32
    %c0_i32_1 = arith.constant 0 : i32
    return %c0_i32, %c0_i32_0 : i32, i32
  }
  func.func @transform_1(%arg0: i32) -> (i32, i32, i32) {
    %c0_i32 = arith.constant 0 : i32
    %c0_i32_0 = arith.constant 0 : i32
    %c0_i32_1 = arith.constant 0 : i32
    return %arg0, %c0_i32, %c0_i32_0 : i32, i32, i32
  }
  func.func @transform_2(%arg0: i32) -> (i32, i32, i32) {
    %c0_i32 = arith.constant 0 : i32
    %c0_i32_0 = arith.constant 0 : i32
    %c0_i32_1 = arith.constant 0 : i32
    return %arg0, %c0_i32, %c0_i32_0 : i32, i32, i32
  }
  func.func @transform_3(%arg0: i32) -> (i32, i32, i32) {
    %c0_i32 = arith.constant 0 : i32
    %c0_i32_0 = arith.constant 0 : i32
    %c0_i32_1 = arith.constant 0 : i32
    return %arg0, %c0_i32, %c0_i32_0 : i32, i32, i32
  }
  func.func @transform_4(%arg0: i32) -> (i32, i32, i32) {
    %c0_i32 = arith.constant 0 : i32
    %c0_i32_0 = arith.constant 0 : i32
    %c0_i32_1 = arith.constant 0 : i32
    return %arg0, %c0_i32, %c0_i32_0 : i32, i32, i32
  }
  func.func @transform_5(%arg0: i32) -> (i32, i32, i32) {
    %c0_i32 = arith.constant 0 : i32
    %c0_i32_0 = arith.constant 0 : i32
    %c0_i32_1 = arith.constant 0 : i32
    return %arg0, %c0_i32, %c0_i32_0 : i32, i32, i32
  }
  func.func @transform_6(%arg0: i32) -> (i32, i32, i32) {
    %c0_i32 = arith.constant 0 : i32
    %c0_i32_0 = arith.constant 0 : i32
    %c0_i32_1 = arith.constant 0 : i32
    return %arg0, %c0_i32, %c0_i32_0 : i32, i32, i32
  }
  func.func @transform_7(%arg0: i32) -> (i32, i32, i32) {
    %c0_i32 = arith.constant 0 : i32
    %c0_i32_0 = arith.constant 0 : i32
    %c0_i32_1 = arith.constant 0 : i32
    return %arg0, %c0_i32, %c0_i32_0 : i32, i32, i32
  }
  func.func @transform_8(%arg0: i32) -> (i32, i32, i32) {
    %c0_i32 = arith.constant 0 : i32
    %c0_i32_0 = arith.constant 0 : i32
    %c0_i32_1 = arith.constant 0 : i32
    return %arg0, %c0_i32, %c0_i32_0 : i32, i32, i32
  }
  func.func @transform_9(%arg0: i32) -> (i32, i32, i32) {
    %c0_i32 = arith.constant 0 : i32
    %c0_i32_0 = arith.constant 0 : i32
    %c0_i32_1 = arith.constant 0 : i32
    return %arg0, %c0_i32, %c0_i32_0 : i32, i32, i32
  }
  func.func @transform_10(%arg0: i32) -> (i32, i32, i32) {
    %c0_i32 = arith.constant 0 : i32
    %c0_i32_0 = arith.constant 0 : i32
    %c0_i32_1 = arith.constant 0 : i32
    return %arg0, %c0_i32, %c0_i32_0 : i32, i32, i32
  }
  func.func @transform_11(%arg0: i32) -> (i32, i32, i32) {
    %c0_i32 = arith.constant 0 : i32
    %c0_i32_0 = arith.constant 0 : i32
    %c0_i32_1 = arith.constant 0 : i32
    return %arg0, %c0_i32, %c0_i32_0 : i32, i32, i32
  }
  func.func @transform_12(%arg0: i32) -> (i32, i32, i32) {
    %c0_i32 = arith.constant 0 : i32
    %c0_i32_0 = arith.constant 0 : i32
    %c0_i32_1 = arith.constant 0 : i32
    return %arg0, %c0_i32, %c0_i32_0 : i32, i32, i32
  }
  func.func @transform_13(%arg0: i32) -> (i32, i32) {
    %c0_i32 = arith.constant 0 : i32
    %c0_i32_0 = arith.constant 0 : i32
    %c0_i32_1 = arith.constant 0 : i32
    return %c0_i32, %c0_i32_0 : i32, i32
  }
}

</mosaic_0001>

<llo_original>
// kernel: tpu_custom_call.1
$region0: #{tpu_custom_call.1}
  #allocation0 [shape = 'u32[]', space=smem, size = 0x4, offset = 0x4, fixed_abs, tag = 'smem constant byte address 0x4 - core index']
  #allocation1 [shape = 'u32[144,128]{1,0:T(1,128)}', space=vmem, size = 0x12000, scoped, tag = 'internal scratch']
  #allocation2 [shape = 'f32[16,32]{1,0:T(8,128)}', space=vmem, size = 0x2000, scoped, tag = 'scratch operand']
  %s0 = inlined_call_operand.vmem [shape: f32[16,32], index: 0, kind: input, shape index: {}]
  %s1 = inlined_call_operand.vmem [shape: f32[2,32,96], index: 1, kind: input, shape index: {}]
  %s2 = inlined_call_operand.vmem [shape: f32[2,1,96], index: 2, kind: input, shape index: {}]
  %s3 = inlined_call_operand.vmem [shape: f32[2,32,32], index: 3, kind: input, shape index: {}]
  %s4 = inlined_call_operand.vmem [shape: f32[2,1,32], index: 4, kind: input, shape index: {}]
  %s5 = inlined_call_operand.vmem [shape: f32[2,1,32], index: 5, kind: input, shape index: {}]
  %s6 = inlined_call_operand.vmem [shape: f32[2,1,32], index: 6, kind: input, shape index: {}]
  %s7 = inlined_call_operand.vmem [shape: f32[2,32,128], index: 7, kind: input, shape index: {}]
  %s8 = inlined_call_operand.vmem [shape: f32[2,1,128], index: 8, kind: input, shape index: {}]
  %s9 = inlined_call_operand.vmem [shape: f32[2,128,32], index: 9, kind: input, shape index: {}]
  %s10 = inlined_call_operand.vmem [shape: f32[2,1,32], index: 10, kind: input, shape index: {}]
  %s11 = inlined_call_operand.vmem [shape: f32[2,1,32], index: 11, kind: input, shape index: {}]
  %s12 = inlined_call_operand.vmem [shape: f32[2,1,32], index: 12, kind: input, shape index: {}]
  %s13 = inlined_call_operand.hbm [shape: f32[16,32], index: 13, kind: output, shape index: {}]
  %s14 = sld [smem:[#allocation0]]
  $region89: #{tpu_custom_call.1} parent=0
    _
  %s16 = ssub.s32 1, %s14
  %s17 = scalar_select 0, %s16, %s14
  $region1: #{tpu_custom_call.1} parent=0
    #allocation3 [shape = 'u8[8192]{0}', space=vmem, size = 0x2000, scoped, tag = 'output window, operand 0, single buffered']
    #allocation4 [shape = 's32[2]{0}', space=sflag, size = 0x8, scoped, tag = 'scoped memory for tpu_custom_call.1']
    %18 = vsyncpa [#allocation4], 0
    loop: start=0, step=1, limit=4
    $region2: #{tpu_custom_call.1} parent=1 // loop_pre_header
      _
    $region3: #{tpu_custom_call.1} parent=1 // loop_header
      %s20 = sphi 0, %s24
      %p21 = scmp.ge.s32.totalorder %s20, 4
      %s28 = sphi 0, %s28
      %s30 = sphi 0, %s28
      %s31 = sphi 0, %s30
      %s45 = sphi 0, %s31
      %s51 = sphi 0, %s53
      %s54 = sphi 0, %s51
      %s55 = sphi 0, %s54
      %s71 = sphi 0, %s55
      %s77 = sphi 0, %s79
      %s80 = sphi 0, %s77
      %s81 = sphi 0, %s80
      %s97 = sphi 0, %s81
      %s103 = sphi 0, %s105
      %s106 = sphi 0, %s103
      %s107 = sphi 0, %s106
      %s123 = sphi 0, %s107
      %s129 = sphi 0, %s131
      %s132 = sphi 0, %s129
      %s133 = sphi 0, %s132
      %s149 = sphi 0, %s133
      %s155 = sphi 0, %s157
      %s158 = sphi 0, %s155
      %s159 = sphi 0, %s158
      %s175 = sphi 0, %s159
      %s181 = sphi 0, %s183
      %s184 = sphi 0, %s181
      %s185 = sphi 0, %s184
      %s201 = sphi 0, %s185
      %s207 = sphi 0, %s209
      %s210 = sphi 0, %s207
      %s211 = sphi 0, %s210
      %s227 = sphi 0, %s211
      %s233 = sphi 0, %s235
      %s236 = sphi 0, %s233
      %s237 = sphi 0, %s236
      %s253 = sphi 0, %s237
      %s259 = sphi 0, %s261
      %s262 = sphi 0, %s259
      %s263 = sphi 0, %s262
      %s279 = sphi 0, %s263
      %s285 = sphi 0, %s287
      %s288 = sphi 0, %s285
      %s289 = sphi 0, %s288
      %s305 = sphi 0, %s289
      %s311 = sphi 0, %s313
      %s314 = sphi 0, %s311
      %s315 = sphi 0, %s314
      %s331 = sphi 0, %s315
      %s337 = sphi 0, %s339
      %s340 = sphi 0, %s337
      %s341 = sphi 0, %s340
      %s357 = sphi 0, %s341
      %s361 = sphi 0, %s361
      %s363 = sphi 0, %s361
      %s364 = sphi 0, %s363
      %s378 = sphi 0, %s364
    $region4: #{tpu_custom_call.1} parent=1 // loop_header_branch
      %23 = sbr.rel (%p21) target = $region8
    $region5: #{tpu_custom_call.1} parent=1 // loop_body
      %s25 = ssub.s32 %s20, 1
      %s26 = ssub.s32 %s20, 2
      %s27 = sadd.s32 %s20, 1
      %s29 = sadd.s32 %s28, 1
      %p32 = scmp.eq.s32.totalorder %s20, 1
      %p33 = scmp.ne.s32.totalorder %s28, %s30
      %p34 = scmp.eq.s32.totalorder %s20, 0
      %p35 = por %p33, %p34
      %p36 = scmp.ne.s32.totalorder %s28, %s30
      %p37 = scmp.eq.s32.totalorder %s25, 1
      %p38 = por %p36, %p37
      %p39 = scmp.ne.s32.totalorder %s30, %s31
      %p40 = scmp.eq.s32.totalorder %s25, 0
      %p41 = por %p39, %p40
      %p42 = scmp.ne.s32.totalorder %s30, %s31
      %p43 = scmp.eq.s32.totalorder %s26, 1
      %p44 = por %p42, %p43
      %p46 = scmp.ne.s32.totalorder %s31, %s45
      %p47 = scmp.eq.s32.totalorder %s26, 0
      %p48 = por %p46, %p47
      %s49 = ssub.s32 %s20, %s27
      %p50 = scmp.eq.s32.totalorder %s49, 0
      %s52 = sadd.s32 %s51, 1
      %s53 = scalar_select %p50, %s51, %s52
      %p56 = pneg %p50
      %p57 = scmp.eq.s32.totalorder %s20, 1
      %p58 = por %p56, %p57
      %p59 = scmp.ne.s32.totalorder %s51, %s54
      %p60 = scmp.eq.s32.totalorder %s20, 0
      %p61 = por %p59, %p60
      %p62 = scmp.ne.s32.totalorder %s51, %s54
      %p63 = scmp.eq.s32.totalorder %s25, 1
      %p64 = por %p62, %p63
      %p65 = scmp.ne.s32.totalorder %s54, %s55
      %p66 = scmp.eq.s32.totalorder %s25, 0
      %p67 = por %p65, %p66
      %p68 = scmp.ne.s32.totalorder %s54, %s55
      %p69 = scmp.eq.s32.totalorder %s26, 1
      %p70 = por %p68, %p69
      %p72 = scmp.ne.s32.totalorder %s55, %s71
      %p73 = scmp.eq.s32.totalorder %s26, 0
      %p74 = por %p72, %p73
      %s75 = ssub.s32 %s20, %s27
      %p76 = scmp.eq.s32.totalorder %s75, 0
      %s78 = sadd.s32 %s77, 1
      %s79 = scalar_select %p76, %s77, %s78
      %p82 = pneg %p76
      %p83 = scmp.eq.s32.totalorder %s20, 1
      %p84 = por %p82, %p83
      %p85 = scmp.ne.s32.totalorder %s77, %s80
      %p86 = scmp.eq.s32.totalorder %s20, 0
      %p87 = por %p85, %p86
      %p88 = scmp.ne.s32.totalorder %s77, %s80
      %p89 = scmp.eq.s32.totalorder %s25, 1
      %p90 = por %p88, %p89
      %p91 = scmp.ne.s32.totalorder %s80, %s81
      %p92 = scmp.eq.s32.totalorder %s25, 0
      %p93 = por %p91, %p92
      %p94 = scmp.ne.s32.totalorder %s80, %s81
      %p95 = scmp.eq.s32.totalorder %s26, 1
      %p96 = por %p94, %p95
      %p98 = scmp.ne.s32.totalorder %s81, %s97
      %p99 = scmp.eq.s32.totalorder %s26, 0
      %p100 = por %p98, %p99
      %s101 = ssub.s32 %s20, %s27
      %p102 = scmp.eq.s32.totalorder %s101, 0
      %s104 = sadd.s32 %s103, 1
      %s105 = scalar_select %p102, %s103, %s104
      %p108 = pneg %p102
      %p109 = scmp.eq.s32.totalorder %s20, 1
      %p110 = por %p108, %p109
      %p111 = scmp.ne.s32.totalorder %s103, %s106
      %p112 = scmp.eq.s32.totalorder %s20, 0
      %p113 = por %p111, %p112
      %p114 = scmp.ne.s32.totalorder %s103, %s106
      %p115 = scmp.eq.s32.totalorder %s25, 1
      %p116 = por %p114, %p115
      %p117 = scmp.ne.s32.totalorder %s106, %s107
      %p118 = scmp.eq.s32.totalorder %s25, 0
      %p119 = por %p117, %p118
      %p120 = scmp.ne.s32.totalorder %s106, %s107
      %p121 = scmp.eq.s32.totalorder %s26, 1
      %p122 = por %p120, %p121
      %p124 = scmp.ne.s32.totalorder %s107, %s123
      %p125 = scmp.eq.s32.totalorder %s26, 0
      %p126 = por %p124, %p125
      %s127 = ssub.s32 %s20, %s27
      %p128 = scmp.eq.s32.totalorder %s127, 0
      %s130 = sadd.s32 %s129, 1
      %s131 = scalar_select %p128, %s129, %s130
      %p134 = pneg %p128
      %p135 = scmp.eq.s32.totalorder %s20, 1
      %p136 = por %p134, %p135
      %p137 = scmp.ne.s32.totalorder %s129, %s132
      %p138 = scmp.eq.s32.totalorder %s20, 0
      %p139 = por %p137, %p138
      %p140 = scmp.ne.s32.totalorder %s129, %s132
      %p141 = scmp.eq.s32.totalorder %s25, 1
      %p142 = por %p140, %p141
      %p143 = scmp.ne.s32.totalorder %s132, %s133
      %p144 = scmp.eq.s32.totalorder %s25, 0
      %p145 = por %p143, %p144
      %p146 = scmp.ne.s32.totalorder %s132, %s133
      %p147 = scmp.eq.s32.totalorder %s26, 1
      %p148 = por %p146, %p147
      %p150 = scmp.ne.s32.totalorder %s133, %s149
      %p151 = scmp.eq.s32.totalorder %s26, 0
      %p152 = por %p150, %p151
      %s153 = ssub.s32 %s20, %s27
      %p154 = scmp.eq.s32.totalorder %s153, 0
      %s156 = sadd.s32 %s155, 1
      %s157 = scalar_select %p154, %s155, %s156
      %p160 = pneg %p154
      %p161 = scmp.eq.s32.totalorder %s20, 1
      %p162 = por %p160, %p161
      %p163 = scmp.ne.s32.totalorder %s155, %s158
      %p164 = scmp.eq.s32.totalorder %s20, 0
      %p165 = por %p163, %p164
      %p166 = scmp.ne.s32.totalorder %s155, %s158
      %p167 = scmp.eq.s32.totalorder %s25, 1
      %p168 = por %p166, %p167
      %p169 = scmp.ne.s32.totalorder %s158, %s159
      %p170 = scmp.eq.s32.totalorder %s25, 0
      %p171 = por %p169, %p170
      %p172 = scmp.ne.s32.totalorder %s158, %s159
      %p173 = scmp.eq.s32.totalorder %s26, 1
      %p174 = por %p172, %p173
      %p176 = scmp.ne.s32.totalorder %s159, %s175
      %p177 = scmp.eq.s32.totalorder %s26, 0
      %p178 = por %p176, %p177
      %s179 = ssub.s32 %s20, %s27
      %p180 = scmp.eq.s32.totalorder %s179, 0
      %s182 = sadd.s32 %s181, 1
      %s183 = scalar_select %p180, %s181, %s182
      %p186 = pneg %p180
      %p187 = scmp.eq.s32.totalorder %s20, 1
      %p188 = por %p186, %p187
      %p189 = scmp.ne.s32.totalorder %s181, %s184
      %p190 = scmp.eq.s32.totalorder %s20, 0
      %p191 = por %p189, %p190
      %p192 = scmp.ne.s32.totalorder %s181, %s184
      %p193 = scmp.eq.s32.totalorder %s25, 1
      %p194 = por %p192, %p193
      %p195 = scmp.ne.s32.totalorder %s184, %s185
      %p196 = scmp.eq.s32.totalorder %s25, 0
      %p197 = por %p195, %p196
      %p198 = scmp.ne.s32.totalorder %s184, %s185
      %p199 = scmp.eq.s32.totalorder %s26, 1
      %p200 = por %p198, %p199
      %p202 = scmp.ne.s32.totalorder %s185, %s201
      %p203 = scmp.eq.s32.totalorder %s26, 0
      %p204 = por %p202, %p203
      %s205 = ssub.s32 %s20, %s27
      %p206 = scmp.eq.s32.totalorder %s205, 0
      %s208 = sadd.s32 %s207, 1
      %s209 = scalar_select %p206, %s207, %s208
      %p212 = pneg %p206
      %p213 = scmp.eq.s32.totalorder %s20, 1
      %p214 = por %p212, %p213
      %p215 = scmp.ne.s32.totalorder %s207, %s210
      %p216 = scmp.eq.s32.totalorder %s20, 0
      %p217 = por %p215, %p216
      %p218 = scmp.ne.s32.totalorder %s207, %s210
      %p219 = scmp.eq.s32.totalorder %s25, 1
      %p220 = por %p218, %p219
      %p221 = scmp.ne.s32.totalorder %s210, %s211
      %p222 = scmp.eq.s32.totalorder %s25, 0
      %p223 = por %p221, %p222
      %p224 = scmp.ne.s32.totalorder %s210, %s211
      %p225 = scmp.eq.s32.totalorder %s26, 1
      %p226 = por %p224, %p225
      %p228 = scmp.ne.s32.totalorder %s211, %s227
      %p229 = scmp.eq.s32.totalorder %s26, 0
      %p230 = por %p228, %p229
      %s231 = ssub.s32 %s20, %s27
      %p232 = scmp.eq.s32.totalorder %s231, 0
      %s234 = sadd.s32 %s233, 1
      %s235 = scalar_select %p232, %s233, %s234
      %p238 = pneg %p232
      %p239 = scmp.eq.s32.totalorder %s20, 1
      %p240 = por %p238, %p239
      %p241 = scmp.ne.s32.totalorder %s233, %s236
      %p242 = scmp.eq.s32.totalorder %s20, 0
      %p243 = por %p241, %p242
      %p244 = scmp.ne.s32.totalorder %s233, %s236
      %p245 = scmp.eq.s32.totalorder %s25, 1
      %p246 = por %p244, %p245
      %p247 = scmp.ne.s32.totalorder %s236, %s237
      %p248 = scmp.eq.s32.totalorder %s25, 0
      %p249 = por %p247, %p248
      %p250 = scmp.ne.s32.totalorder %s236, %s237
      %p251 = scmp.eq.s32.totalorder %s26, 1
      %p252 = por %p250, %p251
      %p254 = scmp.ne.s32.totalorder %s237, %s253
      %p255 = scmp.eq.s32.totalorder %s26, 0
      %p256 = por %p254, %p255
      %s257 = ssub.s32 %s20, %s27
      %p258 = scmp.eq.s32.totalorder %s257, 0
      %s260 = sadd.s32 %s259, 1
      %s261 = scalar_select %p258, %s259, %s260
      %p264 = pneg %p258
      %p265 = scmp.eq.s32.totalorder %s20, 1
      %p266 = por %p264, %p265
      %p267 = scmp.ne.s32.totalorder %s259, %s262
      %p268 = scmp.eq.s32.totalorder %s20, 0
      %p269 = por %p267, %p268
      %p270 = scmp.ne.s32.totalorder %s259, %s262
      %p271 = scmp.eq.s32.totalorder %s25, 1
      %p272 = por %p270, %p271
      %p273 = scmp.ne.s32.totalorder %s262, %s263
      %p274 = scmp.eq.s32.totalorder %s25, 0
      %p275 = por %p273, %p274
      %p276 = scmp.ne.s32.totalorder %s262, %s263
      %p277 = scmp.eq.s32.totalorder %s26, 1
      %p278 = por %p276, %p277
      %p280 = scmp.ne.s32.totalorder %s263, %s279
      %p281 = scmp.eq.s32.totalorder %s26, 0
      %p282 = por %p280, %p281
      %s283 = ssub.s32 %s20, %s27
      %p284 = scmp.eq.s32.totalorder %s283, 0
      %s286 = sadd.s32 %s285, 1
      %s287 = scalar_select %p284, %s285, %s286
      %p290 = pneg %p284
      %p291 = scmp.eq.s32.totalorder %s20, 1
      %p292 = por %p290, %p291
      %p293 = scmp.ne.s32.totalorder %s285, %s288
      %p294 = scmp.eq.s32.totalorder %s20, 0
      %p295 = por %p293, %p294
      %p296 = scmp.ne.s32.totalorder %s285, %s288
      %p297 = scmp.eq.s32.totalorder %s25, 1
      %p298 = por %p296, %p297
      %p299 = scmp.ne.s32.totalorder %s288, %s289
      %p300 = scmp.eq.s32.totalorder %s25, 0
      %p301 = por %p299, %p300
      %p302 = scmp.ne.s32.totalorder %s288, %s289
      %p303 = scmp.eq.s32.totalorder %s26, 1
      %p304 = por %p302, %p303
      %p306 = scmp.ne.s32.totalorder %s289, %s305
      %p307 = scmp.eq.s32.totalorder %s26, 0
      %p308 = por %p306, %p307
      %s309 = ssub.s32 %s20, %s27
      %p310 = scmp.eq.s32.totalorder %s309, 0
      %s312 = sadd.s32 %s311, 1
      %s313 = scalar_select %p310, %s311, %s312
      %p316 = pneg %p310
      %p317 = scmp.eq.s32.totalorder %s20, 1
      %p318 = por %p316, %p317
      %p319 = scmp.ne.s32.totalorder %s311, %s314
      %p320 = scmp.eq.s32.totalorder %s20, 0
      %p321 = por %p319, %p320
      %p322 = scmp.ne.s32.totalorder %s311, %s314
      %p323 = scmp.eq.s32.totalorder %s25, 1
      %p324 = por %p322, %p323
      %p325 = scmp.ne.s32.totalorder %s314, %s315
      %p326 = scmp.eq.s32.totalorder %s25, 0
      %p327 = por %p325, %p326
      %p328 = scmp.ne.s32.totalorder %s314, %s315
      %p329 = scmp.eq.s32.totalorder %s26, 1
      %p330 = por %p328, %p329
      %p332 = scmp.ne.s32.totalorder %s315, %s331
      %p333 = scmp.eq.s32.totalorder %s26, 0
      %p334 = por %p332, %p333
      %s335 = ssub.s32 %s20, %s27
      %p336 = scmp.eq.s32.totalorder %s335, 0
      %s338 = sadd.s32 %s337, 1
      %s339 = scalar_select %p336, %s337, %s338
      %p342 = pneg %p336
      %p343 = scmp.eq.s32.totalorder %s20, 1
      %p344 = por %p342, %p343
      %p345 = scmp.ne.s32.totalorder %s337, %s340
      %p346 = scmp.eq.s32.totalorder %s20, 0
      %p347 = por %p345, %p346
      %p348 = scmp.ne.s32.totalorder %s337, %s340
      %p349 = scmp.eq.s32.totalorder %s25, 1
      %p350 = por %p348, %p349
      %p351 = scmp.ne.s32.totalorder %s340, %s341
      %p352 = scmp.eq.s32.totalorder %s25, 0
      %p353 = por %p351, %p352
      %p354 = scmp.ne.s32.totalorder %s340, %s341
      %p355 = scmp.eq.s32.totalorder %s26, 1
      %p356 = por %p354, %p355
      %p358 = scmp.ne.s32.totalorder %s341, %s357
      %p359 = scmp.eq.s32.totalorder %s26, 0
      %p360 = por %p358, %p359
      %s362 = sadd.s32 %s361, 1
      %p365 = scmp.eq.s32.totalorder %s20, 1
      %p366 = scmp.ne.s32.totalorder %s361, %s363
      %p367 = scmp.eq.s32.totalorder %s20, 0
      %p368 = por %p366, %p367
      %p369 = scmp.ne.s32.totalorder %s361, %s363
      %p370 = scmp.eq.s32.totalorder %s25, 1
      %p371 = por %p369, %p370
      %p372 = scmp.ne.s32.totalorder %s363, %s364
      %p373 = scmp.eq.s32.totalorder %s25, 0
      %p374 = por %p372, %p373
      %p375 = scmp.ne.s32.totalorder %s363, %s364
      %p376 = scmp.eq.s32.totalorder %s26, 1
      %p377 = por %p375, %p376
      %p379 = scmp.ne.s32.totalorder %s364, %s378
      %p380 = scmp.eq.s32.totalorder %s26, 0
      %p381 = por %p379, %p380
      %p382 = scmp.le.s32.totalorder 1, %s20
      %p383 = scmp.lt.s32.totalorder %s20, 3
      %p384 = pnand %p382, %p383
      %p385 = pneg %p384
      // Predicated region
      $region9: #{tpu_custom_call.1} parent=5 // pred_check
        _
      $region10: #{tpu_custom_call.1} parent=5 // pred_check_branch
        %387 = sbr.rel (%p384) target = $region12
      $region11: #{tpu_custom_call.1} parent=5 // pred_region
        %s388 = ssub.s32 %s20, 1
        // Predicated region
        $region13: #{tpu_custom_call.1} parent=11 // pred_check
          %p389 = pneg %p41
        $region14: #{tpu_custom_call.1} parent=11 // pred_check_branch
          %391 = sbr.rel (%p389) target = $region16
        $region15: #{tpu_custom_call.1} parent=11 // pred_region
          _
        $region16: #{tpu_custom_call.1} parent=11 // pred_fallthru
          _
      $region12: #{tpu_custom_call.1} parent=5 // pred_fallthru
        _
      %p392 = scmp.lt.s32.totalorder %s20, 2
      // Predicated region
      $region17: #{tpu_custom_call.1} parent=5 // pred_check
        %p393 = pneg %p392
      $region18: #{tpu_custom_call.1} parent=5 // pred_check_branch
        %395 = sbr.rel (%p393) target = $region20
      $region19: #{tpu_custom_call.1} parent=5 // pred_region
        // Predicated region
        $region21: #{tpu_custom_call.1} parent=19 // pred_check
          %p396 = pneg %p61
        $region22: #{tpu_custom_call.1} parent=19 // pred_check_branch
          %398 = sbr.rel (%p396) target = $region24
        $region23: #{tpu_custom_call.1} parent=19 // pred_region
          %p399 = scmp.lt.s32.totalorder %s20, 1
          %s400 = scalar_select %p399, %s20, 1
          %s401 = smul.addr %s400, 4
          %s402 = smul.addr %s401, 8
          %s403 = scalar_lea.vmem %s1, %s402
        $region24: #{tpu_custom_call.1} parent=19 // pred_fallthru
          _
        // Predicated region
        $region25: #{tpu_custom_call.1} parent=19 // pred_check
          %p404 = pneg %p87
        $region26: #{tpu_custom_call.1} parent=19 // pred_check_branch
          %406 = sbr.rel (%p404) target = $region28
        $region27: #{tpu_custom_call.1} parent=19 // pred_region
          %p407 = scmp.lt.s32.totalorder %s20, 1
          %s408 = scalar_select %p407, %s20, 1
          %s409 = scalar_lea.vmem %s2, %s408
        $region28: #{tpu_custom_call.1} parent=19 // pred_fallthru
          _
        // Predicated region
        $region29: #{tpu_custom_call.1} parent=19 // pred_check
          %p410 = pneg %p113
        $region30: #{tpu_custom_call.1} parent=19 // pred_check_branch
          %412 = sbr.rel (%p410) target = $region32
        $region31: #{tpu_custom_call.1} parent=19 // pred_region
          %p413 = scmp.lt.s32.totalorder %s20, 1
          %s414 = scalar_select %p413, %s20, 1
          %s415 = smul.addr %s414, 4
          %s416 = smul.addr %s415, 8
          %s417 = scalar_lea.vmem %s3, %s416
        $region32: #{tpu_custom_call.1} parent=19 // pred_fallthru
          _
        // Predicated region
        $region33: #{tpu_custom_call.1} parent=19 // pred_check
          %p418 = pneg %p139
        $region34: #{tpu_custom_call.1} parent=19 // pred_check_branch
          %420 = sbr.rel (%p418) target = $region36
        $region35: #{tpu_custom_call.1} parent=19 // pred_region
          %p421 = scmp.lt.s32.totalorder %s20, 1
          %s422 = scalar_select %p421, %s20, 1
          %s423 = scalar_lea.vmem %s4, %s422
        $region36: #{tpu_custom_call.1} parent=19 // pred_fallthru
          _
        // Predicated region
        $region37: #{tpu_custom_call.1} parent=19 // pred_check
          %p424 = pneg %p165
        $region38: #{tpu_custom_call.1} parent=19 // pred_check_branch
          %426 = sbr.rel (%p424) target = $region40
        $region39: #{tpu_custom_call.1} parent=19 // pred_region
          %p427 = scmp.lt.s32.totalorder %s20, 1
          %s428 = scalar_select %p427, %s20, 1
          %s429 = scalar_lea.vmem %s5, %s428
        $region40: #{tpu_custom_call.1} parent=19 // pred_fallthru
          _
        // Predicated region
        $region41: #{tpu_custom_call.1} parent=19 // pred_check
          %p430 = pneg %p191
        $region42: #{tpu_custom_call.1} parent=19 // pred_check_branch
          %432 = sbr.rel (%p430) target = $region44
        $region43: #{tpu_custom_call.1} parent=19 // pred_region
          %p433 = scmp.lt.s32.totalorder %s20, 1
          %s434 = scalar_select %p433, %s20, 1
          %s435 = scalar_lea.vmem %s6, %s434
        $region44: #{tpu_custom_call.1} parent=19 // pred_fallthru
          _
        // Predicated region
        $region45: #{tpu_custom_call.1} parent=19 // pred_check
          %p436 = pneg %p217
        $region46: #{tpu_custom_call.1} parent=19 // pred_check_branch
          %438 = sbr.rel (%p436) target = $region48
        $region47: #{tpu_custom_call.1} parent=19 // pred_region
          %p439 = scmp.lt.s32.totalorder %s20, 1
          %s440 = scalar_select %p439, %s20, 1
          %s441 = smul.addr %s440, 4
          %s442 = smul.addr %s441, 8
          %s443 = scalar_lea.vmem %s7, %s442
        $region48: #{tpu_custom_call.1} parent=19 // pred_fallthru
          _
        // Predicated region
        $region49: #{tpu_custom_call.1} parent=19 // pred_check
          %p444 = pneg %p243
        $region50: #{tpu_custom_call.1} parent=19 // pred_check_branch
          %446 = sbr.rel (%p444) target = $region52
        $region51: #{tpu_custom_call.1} parent=19 // pred_region
          %p447 = scmp.lt.s32.totalorder %s20, 1
          %s448 = scalar_select %p447, %s20, 1
          %s449 = scalar_lea.vmem %s8, %s448
        $region52: #{tpu_custom_call.1} parent=19 // pred_fallthru
          _
        // Predicated region
        $region53: #{tpu_custom_call.1} parent=19 // pred_check
          %p450 = pneg %p269
        $region54: #{tpu_custom_call.1} parent=19 // pred_check_branch
          %452 = sbr.rel (%p450) target = $region56
        $region55: #{tpu_custom_call.1} parent=19 // pred_region
          %p453 = scmp.lt.s32.totalorder %s20, 1
          %s454 = scalar_select %p453, %s20, 1
          %s455 = smul.addr %s454, 16
          %s456 = smul.addr %s455, 8
          %s457 = scalar_lea.vmem %s9, %s456
        $region56: #{tpu_custom_call.1} parent=19 // pred_fallthru
          _
        // Predicated region
        $region57: #{tpu_custom_call.1} parent=19 // pred_check
          %p458 = pneg %p295
        $region58: #{tpu_custom_call.1} parent=19 // pred_check_branch
          %460 = sbr.rel (%p458) target = $region60
        $region59: #{tpu_custom_call.1} parent=19 // pred_region
          %p461 = scmp.lt.s32.totalorder %s20, 1
          %s462 = scalar_select %p461, %s20, 1
          %s463 = scalar_lea.vmem %s10, %s462
        $region60: #{tpu_custom_call.1} parent=19 // pred_fallthru
          _
        // Predicated region
        $region61: #{tpu_custom_call.1} parent=19 // pred_check
          %p464 = pneg %p321
        $region62: #{tpu_custom_call.1} parent=19 // pred_check_branch
          %466 = sbr.rel (%p464) target = $region64
        $region63: #{tpu_custom_call.1} parent=19 // pred_region
          %p467 = scmp.lt.s32.totalorder %s20, 1
          %s468 = scalar_select %p467, %s20, 1
          %s469 = scalar_lea.vmem %s11, %s468
        $region64: #{tpu_custom_call.1} parent=19 // pred_fallthru
          _
        // Predicated region
        $region65: #{tpu_custom_call.1} parent=19 // pred_check
          %p470 = pneg %p347
        $region66: #{tpu_custom_call.1} parent=19 // pred_check_branch
          %472 = sbr.rel (%p470) target = $region68
        $region67: #{tpu_custom_call.1} parent=19 // pred_region
          %p473 = scmp.lt.s32.totalorder %s20, 1
          %s474 = scalar_select %p473, %s20, 1
          %s475 = scalar_lea.vmem %s12, %s474
        $region68: #{tpu_custom_call.1} parent=19 // pred_fallthru
          _
      $region20: #{tpu_custom_call.1} parent=5 // pred_fallthru
        _
      %p476 = scmp.le.s32.totalorder 1, %s20
      %p477 = scmp.lt.s32.totalorder %s20, 3
      %p478 = pnand %p476, %p477
      %p479 = pneg %p478
      // Predicated region
      $region69: #{tpu_custom_call.1} parent=5 // pred_check
        _
      $region70: #{tpu_custom_call.1} parent=5 // pred_check_branch
        %481 = sbr.rel (%p478) target = $region72
      $region71: #{tpu_custom_call.1} parent=5 // pred_region
        %s482 = ssub.s32 %s20, 1
        %p483 = pneg %p41
        %p484 = pneg %p38
        %p485 = scmp.lt.s32.totalorder %s25, 1
        %s486 = scalar_select %p485, %s25, 1
        %s487 = smul.addr %s486, 4
        %s488 = smul.addr %s487, 8
        %s489 = scalar_lea.vmem %s1, %s488
        %p490 = pneg %p67
        %p491 = pneg %p64
        %p492 = scmp.lt.s32.totalorder %s25, 1
        %s493 = scalar_select %p492, %s25, 1
        %s494 = scalar_lea.vmem %s2, %s493
        %p495 = pneg %p93
        %p496 = pneg %p90
        %p497 = scmp.lt.s32.totalorder %s25, 1
        %s498 = scalar_select %p497, %s25, 1
        %s499 = smul.addr %s498, 4
        %s500 = smul.addr %s499, 8
        %s501 = scalar_lea.vmem %s3, %s500
        %p502 = pneg %p119
        %p503 = pneg %p116
        %p504 = scmp.lt.s32.totalorder %s25, 1
        %s505 = scalar_select %p504, %s25, 1
        %s506 = scalar_lea.vmem %s4, %s505
        %p507 = pneg %p145
        %p508 = pneg %p142
        %p509 = scmp.lt.s32.totalorder %s25, 1
        %s510 = scalar_select %p509, %s25, 1
        %s511 = scalar_lea.vmem %s5, %s510
        %p512 = pneg %p171
        %p513 = pneg %p168
        %p514 = scmp.lt.s32.totalorder %s25, 1
        %s515 = scalar_select %p514, %s25, 1
        %s516 = scalar_lea.vmem %s6, %s515
        %p517 = pneg %p197
        %p518 = pneg %p194
        %p519 = scmp.lt.s32.totalorder %s25, 1
        %s520 = scalar_select %p519, %s25, 1
        %s521 = smul.addr %s520, 4
        %s522 = smul.addr %s521, 8
        %s523 = scalar_lea.vmem %s7, %s522
        %p524 = pneg %p223
        %p525 = pneg %p220
        %p526 = scmp.lt.s32.totalorder %s25, 1
        %s527 = scalar_select %p526, %s25, 1
        %s528 = scalar_lea.vmem %s8, %s527
        %p529 = pneg %p249
        %p530 = pneg %p246
        %p531 = scmp.lt.s32.totalorder %s25, 1
        %s532 = scalar_select %p531, %s25, 1
        %s533 = smul.addr %s532, 16
        %s534 = smul.addr %s533, 8
        %s535 = scalar_lea.vmem %s9, %s534
        %p536 = pneg %p275
        %p537 = pneg %p272
        %p538 = scmp.lt.s32.totalorder %s25, 1
        %s539 = scalar_select %p538, %s25, 1
        %s540 = scalar_lea.vmem %s10, %s539
        %p541 = pneg %p301
        %p542 = pneg %p298
        %p543 = scmp.lt.s32.totalorder %s25, 1
        %s544 = scalar_select %p543, %s25, 1
        %s545 = scalar_lea.vmem %s11, %s544
        %p546 = pneg %p327
        %p547 = pneg %p324
        %p548 = scmp.lt.s32.totalorder %s25, 1
        %s549 = scalar_select %p548, %s25, 1
        %s550 = scalar_lea.vmem %s12, %s549
        %p551 = pneg %p353
        %p552 = pneg %p350
        %p553 = pneg %p374
        %p554 = pneg %p371
        %p555 = scmp.lt.s32.totalorder %s25, 1
        %s556 = scalar_select %p555, %s25, 1
        %s557 = smul.addr %s556, 4
        %s558 = smul.addr %s557, 8
        %s559 = scalar_lea.vmem %s1, %s558
        %p560 = scmp.lt.s32.totalorder %s25, 1
        %s561 = scalar_select %p560, %s25, 1
        %s562 = scalar_lea.vmem %s2, %s561
        %p563 = scmp.lt.s32.totalorder %s25, 1
        %s564 = scalar_select %p563, %s25, 1
        %s565 = smul.addr %s564, 4
        %s566 = smul.addr %s565, 8
        %s567 = scalar_lea.vmem %s3, %s566
        %p568 = scmp.lt.s32.totalorder %s25, 1
        %s569 = scalar_select %p568, %s25, 1
        %s570 = scalar_lea.vmem %s4, %s569
        %p571 = scmp.lt.s32.totalorder %s25, 1
        %s572 = scalar_select %p571, %s25, 1
        %s573 = scalar_lea.vmem %s5, %s572
        %p574 = scmp.lt.s32.totalorder %s25, 1
        %s575 = scalar_select %p574, %s25, 1
        %s576 = scalar_lea.vmem %s6, %s575
        %p577 = scmp.lt.s32.totalorder %s25, 1
        %s578 = scalar_select %p577, %s25, 1
        %s579 = smul.addr %s578, 4
        %s580 = smul.addr %s579, 8
        %s581 = scalar_lea.vmem %s7, %s580
        %p582 = scmp.lt.s32.totalorder %s25, 1
        %s583 = scalar_select %p582, %s25, 1
        %s584 = scalar_lea.vmem %s8, %s583
        %p585 = scmp.lt.s32.totalorder %s25, 1
        %s586 = scalar_select %p585, %s25, 1
        %s587 = smul.addr %s586, 16
        %s588 = smul.addr %s587, 8
        %s589 = scalar_lea.vmem %s9, %s588
        %p590 = scmp.lt.s32.totalorder %s25, 1
        %s591 = scalar_select %p590, %s25, 1
        %s592 = scalar_lea.vmem %s10, %s591
        %p593 = scmp.lt.s32.totalorder %s25, 1
        %s594 = scalar_select %p593, %s25, 1
        %s595 = scalar_lea.vmem %s11, %s594
        %p596 = scmp.lt.s32.totalorder %s25, 1
        %s597 = scalar_select %p596, %s25, 1
        %s598 = scalar_lea.vmem %s12, %s597
        %p599 = scmp.eq.s32.totalorder %s25, 0
        // Predicated region
        $region73: #{tpu_custom_call.1} parent=71 // pred_check
          %p600 = pneg %p599
        $region74: #{tpu_custom_call.1} parent=71 // pred_check_branch
          %602 = sbr.rel (%p600) target = $region76
        $region75: #{tpu_custom_call.1} parent=71 // pred_region
          %v603 = vld [vmem:[%s0] sm:$0xff]
          %v604 = vld [vmem:[%s0 + $0x8] sm:$0xff]
          %vm605 = vcmask 261120
          %606 = vst.msk [vmem:[#allocation2] sm:$0xff] %vm605, %v603
          %607 = vst.msk [vmem:[#allocation2 + $0x8] sm:$0xff] %vm605, %v604
        $region76: #{tpu_custom_call.1} parent=71 // pred_fallthru
          _
        %v608 = vld [vmem:[#allocation2] sm:$0xff]
        %v609 = vld [vmem:[#allocation2 + $0x8] sm:$0xff]
        %v610 = vld [vmem:[%s559] sm:$0xff]
        %v611 = vld [vmem:[%s559 + $0x8] sm:$0xff]
        %v612 = vld [vmem:[%s559 + $0x10] sm:$0xff]
        %v613 = vld [vmem:[%s559 + $0x18] sm:$0xff]
        %v614 = vld [vmem:[%s562] sm:$0x1]
        %v616 = vlaneseq
        %v617 = vshrl.u32 %v616, 7
        %v618 = vsub.s32 0, %v617
        %v619 = vrot.slane %v614, %v618
        %vm621 = vcmask 261120
        %v623 = vsel %vm621, %v608, 0
        %v626 = vsel %vm621, %v609, 0
        %628 = vmatprep.subr.mxu0 0.0
        %629 = vmatpush1.msra.mxu0 0.0
        %630 = vmatprep.subr.mxu0 0.0
        %631 = vmatpush1.msra.mxu0 0.0
        %632 = vmatprep.subr.mxu0 0.0
        %633 = vmatpush1.msra.mxu0 0.0
        %634 = vmatprep.subr.mxu0 0.0
        %635 = vmatpush1.msra.mxu0 0.0
        %636 = vmatprep.subr.mxu0 0.0
        %637 = vmatpush1.msra.mxu0 0.0
        %638 = vmatprep.subr.mxu0 0.0
        %639 = vmatpush1.msra.mxu0 0.0
        %640 = vmatprep.subr.mxu0 0.0
        %641 = vmatpush1.msra.mxu0 0.0
        %642 = vmatprep.subr.mxu0 0.0
        %643 = vmatpush1.msra.mxu0 0.0
        %644 = vmatprep.subr.mxu0 0.0
        %645 = vmatpush1.msra.mxu0 0.0
        %646 = vmatprep.subr.mxu0 0.0
        %647 = vmatpush1.msra.mxu0 0.0
        %648 = vmatprep.subr.mxu0 0.0
        %649 = vmatpush1.msra.mxu0 0.0
        %650 = vmatprep.subr.mxu0 0.0
        %651 = vmatpush1.msra.mxu0 0.0
        %652 = vmatprep.subr.mxu0 0.0
        %653 = vmatpush1.msra.mxu0 %v613
        %654 = vmatprep.subr.mxu0 0.0
        %655 = vmatpush1.msra.mxu0 %v612
        %656 = vmatprep.subr.mxu0 0.0
        %657 = vmatpush1.msra.mxu0 %v611
        %658 = vmatprep.subr.mxu0 0.0
        %659 = vmatpush1.msra.mxu0 %v610
        %660 = vmatprep.subr.mxu0 0.0
        %661 = vmatpush2.msra.mxu0 0.0
        %662 = vmatprep.subr.mxu0 0.0
        %663 = vmatpush2.msra.mxu0 0.0
        %664 = vmatprep.subr.mxu0 0.0
        %665 = vmatpush2.msra.mxu0 0.0
        %666 = vmatprep.subr.mxu0 0.0
        %667 = vmatpush2.msra.mxu0 0.0
        %668 = vmatprep.subr.mxu0 0.0
        %669 = vmatpush2.msra.mxu0 0.0
        %670 = vmatprep.subr.mxu0 0.0
        %671 = vmatpush2.msra.mxu0 0.0
        %672 = vmatprep.subr.mxu0 0.0
        %673 = vmatpush2.msra.mxu0 0.0
        %674 = vmatprep.subr.mxu0 0.0
        %675 = vmatpush2.msra.mxu0 0.0
        %676 = vmatprep.subr.mxu0 0.0
        %677 = vmatpush2.msra.mxu0 0.0
        %678 = vmatprep.subr.mxu0 0.0
        %679 = vmatpush2.msra.mxu0 0.0
        %680 = vmatprep.subr.mxu0 0.0
        %681 = vmatpush2.msra.mxu0 0.0
        %682 = vmatprep.subr.mxu0 0.0
        %683 = vmatpush2.msra.mxu0 0.0
        %684 = vmatprep.subr.mxu0 0.0
        %685 = vmatpush2.msra.mxu0 0.0
        %686 = vmatprep.subr.mxu0 0.0
        %687 = vmatpush2.msra.mxu0 0.0
        %688 = vmatprep.subr.mxu0 0.0
        %689 = vmatpush2.msra.mxu0 0.0
        %690 = vmatprep.subr.mxu0 0.0
        %691 = vmatpush2.msra.mxu0 0.0
        %692 = vmatprep.mubr.f32.mxu0 0.0
        %693 = vmatmul.mubr.f32.gmra.mxu0 %v623
        %v694 = vpop.f32.mrf.mxu0
        %v695 = vadd.f32 %v619, %v694
        %v696 = vpop.f32.mrf.mxu0
        %697 = vmatprep.mubr.f32.mxu0 0.0
        %698 = vmatmul.mubr.f32.gmra.mxu0 %v626
        %v699 = vpop.f32.mrf.mxu0
        %v700 = vadd.f32 %v619, %v699
        %v701 = vpop.f32.mrf.mxu0
        %702 = vdwg.mxu0
        %704 = vrot.lane.b32.xlu0 %v695, 96
        %v705 = vpop.permute.xlu0 %704
        %v707 = vmul.f32 %v695, %v705
        %vm708 = vcmask 64512
        %v709 = vsel %vm708, %v707, 0.0
        %710 = vadd.xlane.f32.xlu0 %v709
        %v711 = vpop.xlane.xlu0 %710
        %v712 = vmul.f32 %v711, 0.35355338
        %714 = vrot.lane.b32.xlu0 %v700, 96
        %v715 = vpop.permute.xlu0 %714
        %v717 = vmul.f32 %v695, %v715
        %v718 = vsel %vm708, %v717, 0.0
        %719 = vadd.xlane.f32.xlu0 %v718
        %v720 = vpop.xlane.xlu0 %719
        %v721 = vmul.f32 %v720, 0.35355338
        %vm722 = vcmask 7168
        %v723 = vsel %vm722, %v712, %v721
        %vm724 = vcmask 15360
        %v725 = vsel %vm724, %v723, -inf
        %726 = vmax.xlane.f32.xlu0 %v725
        %v727 = vpop.xlane.xlu0 %726
        %v728 = vsub.f32 %v723, %v727
        %v729 = vmul.f32 %v728, 1.442695
        %v730 = vpow.pop %v729
        %v731 = vsel %vm724, %v730, 0.0
        %732 = vadd.xlane.f32.xlu0 %v731
        %v733 = vpop.xlane.xlu0 %732
        %v734 = vrcp.pop %v733
        %v735 = vmul.f32 %v730, %v734
        %737 = vset.pattern.permute.xlu0 0
        %738 = vperm.xlu0 %737, %v735
        %v739 = vpop.permute.xlu0 %738
        %v741 = vmul.f32 %v739, %v695
        %v742 = vadd.f32 %v741, 0.0
        %743 = vset.pattern.permute.xlu0 1
        %744 = vperm.xlu0 %743, %v735
        %v745 = vpop.permute.xlu0 %744
        %v747 = vmul.f32 %v745, %v700
        %v748 = vadd.f32 %v742, %v747
        %750 = vrot.lane.b32.xlu0 %v707, 120
        %v751 = vpop.permute.xlu0 %750
        %v753 = vsel %vm708, %v751, 0.0
        %754 = vadd.xlane.f32.xlu0 %v753
        %v755 = vpop.xlane.xlu0 %754
        %v756 = vmul.f32 %v755, 0.35355338
        %758 = vrot.lane.b32.xlu0 %v717, 120
        %v759 = vpop.permute.xlu0 %758
        %v761 = vsel %vm708, %v759, 0.0
        %762 = vadd.xlane.f32.xlu0 %v761
        %v763 = vpop.xlane.xlu0 %762
        %v764 = vmul.f32 %v763, 0.35355338
        %v765 = vsel %vm722, %v756, %v764
        %v766 = vsel %vm724, %v765, -inf
        %767 = vmax.xlane.f32.xlu0 %v766
        %v768 = vpop.xlane.xlu0 %767
        %v769 = vsub.f32 %v765, %v768
        %v770 = vmul.f32 %v769, 1.442695
        %v771 = vpow.pop %v770
        %v772 = vsel %vm724, %v771, 0.0
        %773 = vadd.xlane.f32.xlu0 %v772
        %v774 = vpop.xlane.xlu0 %773
        %v775 = vrcp.pop %v774
        %v776 = vmul.f32 %v771, %v775
        %778 = vset.pattern.permute.xlu0 0
        %779 = vperm.xlu0 %778, %v776
        %v780 = vpop.permute.xlu0 %779
        %v782 = vmul.f32 %v780, %v695
        %v783 = vadd.f32 %v782, 0.0
        %784 = vset.pattern.permute.xlu0 1
        %785 = vperm.xlu0 %784, %v776
        %v786 = vpop.permute.xlu0 %785
        %v788 = vmul.f32 %v786, %v700
        %v789 = vadd.f32 %v783, %v788
        %790 = vrot.lane.b32.xlu0 %v707, 112
        %v791 = vpop.permute.xlu0 %790
        %v793 = vsel %vm708, %v791, 0.0
        %794 = vadd.xlane.f32.xlu0 %v793
        %v795 = vpop.xlane.xlu0 %794
        %v796 = vmul.f32 %v795, 0.35355338
        %797 = vrot.lane.b32.xlu0 %v717, 112
        %v798 = vpop.permute.xlu0 %797
        %v800 = vsel %vm708, %v798, 0.0
        %801 = vadd.xlane.f32.xlu0 %v800
        %v802 = vpop.xlane.xlu0 %801
        %v803 = vmul.f32 %v802, 0.35355338
        %v804 = vsel %vm722, %v796, %v803
        %v805 = vsel %vm724, %v804, -inf
        %806 = vmax.xlane.f32.xlu0 %v805
        %v807 = vpop.xlane.xlu0 %806
        %v808 = vsub.f32 %v804, %v807
        %v809 = vmul.f32 %v808, 1.442695
        %v810 = vpow.pop %v809
        %v811 = vsel %vm724, %v810, 0.0
        %812 = vadd.xlane.f32.xlu0 %v811
        %v813 = vpop.xlane.xlu0 %812
        %v814 = vrcp.pop %v813
        %v815 = vmul.f32 %v810, %v814
        %817 = vset.pattern.permute.xlu0 0
        %818 = vperm.xlu0 %817, %v815
        %v819 = vpop.permute.xlu0 %818
        %v821 = vmul.f32 %v819, %v695
        %v822 = vadd.f32 %v821, 0.0
        %823 = vset.pattern.permute.xlu0 1
        %824 = vperm.xlu0 %823, %v815
        %v825 = vpop.permute.xlu0 %824
        %v827 = vmul.f32 %v825, %v700
        %v828 = vadd.f32 %v822, %v827
        %829 = vrot.lane.b32.xlu0 %v707, 104
        %v830 = vpop.permute.xlu0 %829
        %v832 = vsel %vm708, %v830, 0.0
        %833 = vadd.xlane.f32.xlu0 %v832
        %v834 = vpop.xlane.xlu0 %833
        %v835 = vmul.f32 %v834, 0.35355338
        %836 = vrot.lane.b32.xlu0 %v717, 104
        %v837 = vpop.permute.xlu0 %836
        %v839 = vsel %vm708, %v837, 0.0
        %840 = vadd.xlane.f32.xlu0 %v839
        %v841 = vpop.xlane.xlu0 %840
        %v842 = vmul.f32 %v841, 0.35355338
        %v843 = vsel %vm722, %v835, %v842
        %v844 = vsel %vm724, %v843, -inf
        %845 = vmax.xlane.f32.xlu0 %v844
        %v846 = vpop.xlane.xlu0 %845
        %v847 = vsub.f32 %v843, %v846
        %v848 = vmul.f32 %v847, 1.442695
        %v849 = vpow.pop %v848
        %v850 = vsel %vm724, %v849, 0.0
        %851 = vadd.xlane.f32.xlu0 %v850
        %v852 = vpop.xlane.xlu0 %851
        %v853 = vrcp.pop %v852
        %v854 = vmul.f32 %v849, %v853
        %856 = vset.pattern.permute.xlu0 0
        %857 = vperm.xlu0 %856, %v854
        %v858 = vpop.permute.xlu0 %857
        %v860 = vmul.f32 %v858, %v695
        %v861 = vadd.f32 %v860, 0.0
        %862 = vset.pattern.permute.xlu0 1
        %863 = vperm.xlu0 %862, %v854
        %v864 = vpop.permute.xlu0 %863
        %v866 = vmul.f32 %v864, %v700
        %v867 = vadd.f32 %v861, %v866
        %869 = vrot.lane.b32.xlu0 %v748, 64
        %v870 = vpop.permute.xlu0 %869
        %873 = vrot.lane.b32.xlu0 %v789, 64
        %v874 = vpop.permute.xlu0 %873
        %877 = vrot.lane.b32.xlu0 %v828, 64
        %v878 = vpop.permute.xlu0 %877
        %881 = vrot.lane.b32.xlu0 %v867, 64
        %v882 = vpop.permute.xlu0 %881
        %v884 = vsel %vm708, %v870, %v874
        %vm885 = vcmask 130048
        %v886 = vsel %vm885, %v884, %v878
        %vm887 = vcmask 195584
        %v888 = vsel %vm887, %v886, %v882
        %v889 = vmul.f32 %v700, %v705
        %v890 = vsel %vm708, %v889, 0.0
        %891 = vadd.xlane.f32.xlu0 %v890
        %v892 = vpop.xlane.xlu0 %891
        %v893 = vmul.f32 %v892, 0.35355338
        %v894 = vmul.f32 %v700, %v715
        %v895 = vsel %vm708, %v894, 0.0
        %896 = vadd.xlane.f32.xlu0 %v895
        %v897 = vpop.xlane.xlu0 %896
        %v898 = vmul.f32 %v897, 0.35355338
        %v899 = vsel %vm722, %v893, %v898
        %v900 = vsel %vm724, %v899, -inf
        %901 = vmax.xlane.f32.xlu0 %v900
        %v902 = vpop.xlane.xlu0 %901
        %v903 = vsub.f32 %v899, %v902
        %v904 = vmul.f32 %v903, 1.442695
        %v905 = vpow.pop %v904
        %v906 = vsel %vm724, %v905, 0.0
        %907 = vadd.xlane.f32.xlu0 %v906
        %v908 = vpop.xlane.xlu0 %907
        %v909 = vrcp.pop %v908
        %v910 = vmul.f32 %v905, %v909
        %912 = vset.pattern.permute.xlu0 0
        %913 = vperm.xlu0 %912, %v910
        %v914 = vpop.permute.xlu0 %913
        %v916 = vmul.f32 %v914, %v695
        %v917 = vadd.f32 %v916, 0.0
        %918 = vset.pattern.permute.xlu0 1
        %919 = vperm.xlu0 %918, %v910
        %v920 = vpop.permute.xlu0 %919
        %v922 = vmul.f32 %v920, %v700
        %v923 = vadd.f32 %v917, %v922
        %925 = vrot.lane.b32.xlu0 %v889, 120
        %v926 = vpop.permute.xlu0 %925
        %v928 = vsel %vm708, %v926, 0.0
        %929 = vadd.xlane.f32.xlu0 %v928
        %v930 = vpop.xlane.xlu0 %929
        %v931 = vmul.f32 %v930, 0.35355338
        %933 = vrot.lane.b32.xlu0 %v894, 120
        %v934 = vpop.permute.xlu0 %933
        %v936 = vsel %vm708, %v934, 0.0
        %937 = vadd.xlane.f32.xlu0 %v936
        %v938 = vpop.xlane.xlu0 %937
        %v939 = vmul.f32 %v938, 0.35355338
        %v940 = vsel %vm722, %v931, %v939
        %v941 = vsel %vm724, %v940, -inf
        %942 = vmax.xlane.f32.xlu0 %v941
        %v943 = vpop.xlane.xlu0 %942
        %v944 = vsub.f32 %v940, %v943
        %v945 = vmul.f32 %v944, 1.442695
        %v946 = vpow.pop %v945
        %v947 = vsel %vm724, %v946, 0.0
        %948 = vadd.xlane.f32.xlu0 %v947
        %v949 = vpop.xlane.xlu0 %948
        %v950 = vrcp.pop %v949
        %v951 = vmul.f32 %v946, %v950
        %953 = vset.pattern.permute.xlu0 0
        %954 = vperm.xlu0 %953, %v951
        %v955 = vpop.permute.xlu0 %954
        %v957 = vmul.f32 %v955, %v695
        %v958 = vadd.f32 %v957, 0.0
        %959 = vset.pattern.permute.xlu0 1
        %960 = vperm.xlu0 %959, %v951
        %v961 = vpop.permute.xlu0 %960
        %v963 = vmul.f32 %v961, %v700
        %v964 = vadd.f32 %v958, %v963
        %965 = vrot.lane.b32.xlu0 %v889, 112
        %v966 = vpop.permute.xlu0 %965
        %v968 = vsel %vm708, %v966, 0.0
        %969 = vadd.xlane.f32.xlu0 %v968
        %v970 = vpop.xlane.xlu0 %969
        %v971 = vmul.f32 %v970, 0.35355338
        %972 = vrot.lane.b32.xlu0 %v894, 112
        %v973 = vpop.permute.xlu0 %972
        %v975 = vsel %vm708, %v973, 0.0
        %976 = vadd.xlane.f32.xlu0 %v975
        %v977 = vpop.xlane.xlu0 %976
        %v978 = vmul.f32 %v977, 0.35355338
        %v979 = vsel %vm722, %v971, %v978
        %v980 = vsel %vm724, %v979, -inf
        %981 = vmax.xlane.f32.xlu0 %v980
        %v982 = vpop.xlane.xlu0 %981
        %v983 = vsub.f32 %v979, %v982
        %v984 = vmul.f32 %v983, 1.442695
        %v985 = vpow.pop %v984
        %v986 = vsel %vm724, %v985, 0.0
        %987 = vadd.xlane.f32.xlu0 %v986
        %v988 = vpop.xlane.xlu0 %987
        %v989 = vrcp.pop %v988
        %v990 = vmul.f32 %v985, %v989
        %992 = vset.pattern.permute.xlu0 0
        %993 = vperm.xlu0 %992, %v990
        %v994 = vpop.permute.xlu0 %993
        %v996 = vmul.f32 %v994, %v695
        %v997 = vadd.f32 %v996, 0.0
        %998 = vset.pattern.permute.xlu0 1
        %999 = vperm.xlu0 %998, %v990
        %v1000 = vpop.permute.xlu0 %999
        %v1002 = vmul.f32 %v1000, %v700
        %v1003 = vadd.f32 %v997, %v1002
        %1004 = vrot.lane.b32.xlu0 %v889, 104
        %v1005 = vpop.permute.xlu0 %1004
        %v1007 = vsel %vm708, %v1005, 0.0
        %1008 = vadd.xlane.f32.xlu0 %v1007
        %v1009 = vpop.xlane.xlu0 %1008
        %v1010 = vmul.f32 %v1009, 0.35355338
        %1011 = vrot.lane.b32.xlu0 %v894, 104
        %v1012 = vpop.permute.xlu0 %1011
        %v1014 = vsel %vm708, %v1012, 0.0
        %1015 = vadd.xlane.f32.xlu0 %v1014
        %v1016 = vpop.xlane.xlu0 %1015
        %v1017 = vmul.f32 %v1016, 0.35355338
        %v1018 = vsel %vm722, %v1010, %v1017
        %v1019 = vsel %vm724, %v1018, -inf
        %1020 = vmax.xlane.f32.xlu0 %v1019
        %v1021 = vpop.xlane.xlu0 %1020
        %v1022 = vsub.f32 %v1018, %v1021
        %v1023 = vmul.f32 %v1022, 1.442695
        %v1024 = vpow.pop %v1023
        %v1025 = vsel %vm724, %v1024, 0.0
        %1026 = vadd.xlane.f32.xlu0 %v1025
        %v1027 = vpop.xlane.xlu0 %1026
        %v1028 = vrcp.pop %v1027
        %v1029 = vmul.f32 %v1024, %v1028
        %1031 = vset.pattern.permute.xlu0 0
        %1032 = vperm.xlu0 %1031, %v1029
        %v1033 = vpop.permute.xlu0 %1032
        %v1035 = vmul.f32 %v1033, %v695
        %v1036 = vadd.f32 %v1035, 0.0
        %1037 = vset.pattern.permute.xlu0 1
        %1038 = vperm.xlu0 %1037, %v1029
        %v1039 = vpop.permute.xlu0 %1038
        %v1041 = vmul.f32 %v1039, %v700
        %v1042 = vadd.f32 %v1036, %v1041
        %1044 = vrot.lane.b32.xlu0 %v923, 64
        %v1045 = vpop.permute.xlu0 %1044
        %1048 = vrot.lane.b32.xlu0 %v964, 64
        %v1049 = vpop.permute.xlu0 %1048
        %1052 = vrot.lane.b32.xlu0 %v1003, 64
        %v1053 = vpop.permute.xlu0 %1052
        %1056 = vrot.lane.b32.xlu0 %v1042, 64
        %v1057 = vpop.permute.xlu0 %1056
        %v1059 = vsel %vm708, %v1045, %v1049
        %v1060 = vsel %vm885, %v1059, %v1053
        %v1061 = vsel %vm887, %v1060, %v1057
        %v1062 = vld [vmem:[%s567] sm:$0xff]
        %v1063 = vld [vmem:[%s567 + $0x8] sm:$0xff]
        %v1064 = vld [vmem:[%s567 + $0x10] sm:$0xff]
        %v1065 = vld [vmem:[%s567 + $0x18] sm:$0xff]
        %v1066 = vld [vmem:[%s570] sm:$0x1]
        %v1068 = vlaneseq
        %v1069 = vshrl.u32 %v1068, 7
        %v1070 = vsub.s32 0, %v1069
        %v1071 = vrot.slane %v1066, %v1070
        %v1074 = vsel %vm621, %v888, 0
        %v1077 = vsel %vm621, %v1061, 0
        %1079 = vmatprep.subr.mxu0 0.0
        %1080 = vmatpush1.msra.mxu0 0.0
        %1081 = vmatprep.subr.mxu0 0.0
        %1082 = vmatpush1.msra.mxu0 0.0
        %1083 = vmatprep.subr.mxu0 0.0
        %1084 = vmatpush1.msra.mxu0 0.0
        %1085 = vmatprep.subr.mxu0 0.0
        %1086 = vmatpush1.msra.mxu0 0.0
        %1087 = vmatprep.subr.mxu0 0.0
        %1088 = vmatpush1.msra.mxu0 0.0
        %1089 = vmatprep.subr.mxu0 0.0
        %1090 = vmatpush1.msra.mxu0 0.0
        %1091 = vmatprep.subr.mxu0 0.0
        %1092 = vmatpush1.msra.mxu0 0.0
        %1093 = vmatprep.subr.mxu0 0.0
        %1094 = vmatpush1.msra.mxu0 0.0
        %1095 = vmatprep.subr.mxu0 0.0
        %1096 = vmatpush1.msra.mxu0 0.0
        %1097 = vmatprep.subr.mxu0 0.0
        %1098 = vmatpush1.msra.mxu0 0.0
        %1099 = vmatprep.subr.mxu0 0.0
        %1100 = vmatpush1.msra.mxu0 0.0
        %1101 = vmatprep.subr.mxu0 0.0
        %1102 = vmatpush1.msra.mxu0 0.0
        %1103 = vmatprep.subr.mxu0 0.0
        %1104 = vmatpush1.msra.mxu0 %v1065
        %1105 = vmatprep.subr.mxu0 0.0
        %1106 = vmatpush1.msra.mxu0 %v1064
        %1107 = vmatprep.subr.mxu0 0.0
        %1108 = vmatpush1.msra.mxu0 %v1063
        %1109 = vmatprep.subr.mxu0 0.0
        %1110 = vmatpush1.msra.mxu0 %v1062
        %1111 = vmatprep.subr.mxu0 0.0
        %1112 = vmatpush2.msra.mxu0 0.0
        %1113 = vmatprep.subr.mxu0 0.0
        %1114 = vmatpush2.msra.mxu0 0.0
        %1115 = vmatprep.subr.mxu0 0.0
        %1116 = vmatpush2.msra.mxu0 0.0
        %1117 = vmatprep.subr.mxu0 0.0
        %1118 = vmatpush2.msra.mxu0 0.0
        %1119 = vmatprep.subr.mxu0 0.0
        %1120 = vmatpush2.msra.mxu0 0.0
        %1121 = vmatprep.subr.mxu0 0.0
        %1122 = vmatpush2.msra.mxu0 0.0
        %1123 = vmatprep.subr.mxu0 0.0
        %1124 = vmatpush2.msra.mxu0 0.0
        %1125 = vmatprep.subr.mxu0 0.0
        %1126 = vmatpush2.msra.mxu0 0.0
        %1127 = vmatprep.subr.mxu0 0.0
        %1128 = vmatpush2.msra.mxu0 0.0
        %1129 = vmatprep.subr.mxu0 0.0
        %1130 = vmatpush2.msra.mxu0 0.0
        %1131 = vmatprep.subr.mxu0 0.0
        %1132 = vmatpush2.msra.mxu0 0.0
        %1133 = vmatprep.subr.mxu0 0.0
        %1134 = vmatpush2.msra.mxu0 0.0
        %1135 = vmatprep.subr.mxu0 0.0
        %1136 = vmatpush2.msra.mxu0 0.0
        %1137 = vmatprep.subr.mxu0 0.0
        %1138 = vmatpush2.msra.mxu0 0.0
        %1139 = vmatprep.subr.mxu0 0.0
        %1140 = vmatpush2.msra.mxu0 0.0
        %1141 = vmatprep.subr.mxu0 0.0
        %1142 = vmatpush2.msra.mxu0 0.0
        %1143 = vmatprep.mubr.f32.mxu0 0.0
        %1144 = vmatmul.mubr.f32.gmra.mxu0 %v1074
        %v1145 = vpop.f32.mrf.mxu0
        %v1146 = vadd.f32 %v1071, %v1145
        %v1147 = vpop.f32.mrf.mxu0
        %1148 = vmatprep.mubr.f32.mxu0 0.0
        %1149 = vmatmul.mubr.f32.gmra.mxu0 %v1077
        %v1150 = vpop.f32.mrf.mxu0
        %v1151 = vadd.f32 %v1071, %v1150
        %v1152 = vpop.f32.mrf.mxu0
        %1153 = vdwg.mxu0
        %v1154 = vadd.f32 %v608, %v1146
        %v1155 = vadd.f32 %v609, %v1151
        %v1156 = vld [vmem:[%s573] sm:$0x1]
        %v1157 = vld [vmem:[%s576] sm:$0x1]
        %v1158 = vsel %vm621, %v1154, 0.0
        %1159 = vadd.xlane.f32.xlu0 %v1158
        %v1160 = vpop.xlane.xlu0 %1159
        %v1161 = vsel %vm621, %v1155, 0.0
        %1162 = vadd.xlane.f32.xlu0 %v1161
        %v1163 = vpop.xlane.xlu0 %1162
        %v1164 = vrcp.pop 32.0
        %v1165 = vmul.f32 %v1160, %v1164
        %v1166 = vmul.f32 %v1163, %v1164
        %v1167 = vsub.f32 %v1154, %v1165
        %v1168 = vsub.f32 %v1155, %v1166
        %v1169 = vmul.f32 %v1167, %v1167
        %v1170 = vmul.f32 %v1168, %v1168
        %v1171 = vsel %vm621, %v1169, 0.0
        %1172 = vadd.xlane.f32.xlu0 %v1171
        %v1173 = vpop.xlane.xlu0 %1172
        %v1174 = vsel %vm621, %v1170, 0.0
        %1175 = vadd.xlane.f32.xlu0 %v1174
        %v1176 = vpop.xlane.xlu0 %1175
        %v1177 = vmul.f32 %v1173, %v1164
        %v1178 = vmul.f32 %v1176, %v1164
        %v1179 = vadd.f32 %v1177, 1e-05
        %v1180 = vadd.f32 %v1178, 1e-05
        %v1181 = vrsqrt.pop %v1179
        %v1182 = vrsqrt.pop %v1180
        %v1183 = vmul.f32 %v1167, %v1181
        %v1184 = vmul.f32 %v1168, %v1182
        %v1186 = vlaneseq
        %v1187 = vshrl.u32 %v1186, 7
        %v1188 = vsub.s32 0, %v1187
        %v1189 = vrot.slane %v1156, %v1188
        %v1191 = vmul.f32 %v1183, %v1189
        %v1192 = vmul.f32 %v1184, %v1189
        %v1194 = vlaneseq
        %v1195 = vshrl.u32 %v1194, 7
        %v1196 = vsub.s32 0, %v1195
        %v1197 = vrot.slane %v1157, %v1196
        %v1199 = vadd.f32 %v1191, %v1197
        %v1200 = vadd.f32 %v1192, %v1197
        %v1201 = vld [vmem:[%s581] sm:$0xff]
        %v1202 = vld [vmem:[%s581 + $0x8] sm:$0xff]
        %v1203 = vld [vmem:[%s581 + $0x10] sm:$0xff]
        %v1204 = vld [vmem:[%s581 + $0x18] sm:$0xff]
        %v1205 = vld [vmem:[%s584] sm:$0x1]
        %v1207 = vlaneseq
        %v1208 = vshrl.u32 %v1207, 7
        %v1209 = vsub.s32 0, %v1208
        %v1210 = vrot.slane %v1205, %v1209
        %v1213 = vsel %vm621, %v1199, 0
        %v1216 = vsel %vm621, %v1200, 0
        %1218 = vmatprep.subr.mxu0 0.0
        %1219 = vmatpush1.msra.mxu0 0.0
        %1220 = vmatprep.subr.mxu0 0.0
        %1221 = vmatpush1.msra.mxu0 0.0
        %1222 = vmatprep.subr.mxu0 0.0
        %1223 = vmatpush1.msra.mxu0 0.0
        %1224 = vmatprep.subr.mxu0 0.0
        %1225 = vmatpush1.msra.mxu0 0.0
        %1226 = vmatprep.subr.mxu0 0.0
        %1227 = vmatpush1.msra.mxu0 0.0
        %1228 = vmatprep.subr.mxu0 0.0
        %1229 = vmatpush1.msra.mxu0 0.0
        %1230 = vmatprep.subr.mxu0 0.0
        %1231 = vmatpush1.msra.mxu0 0.0
        %1232 = vmatprep.subr.mxu0 0.0
        %1233 = vmatpush1.msra.mxu0 0.0
        %1234 = vmatprep.subr.mxu0 0.0
        %1235 = vmatpush1.msra.mxu0 0.0
        %1236 = vmatprep.subr.mxu0 0.0
        %1237 = vmatpush1.msra.mxu0 0.0
        %1238 = vmatprep.subr.mxu0 0.0
        %1239 = vmatpush1.msra.mxu0 0.0
        %1240 = vmatprep.subr.mxu0 0.0
        %1241 = vmatpush1.msra.mxu0 0.0
        %1242 = vmatprep.subr.mxu0 0.0
        %1243 = vmatpush1.msra.mxu0 %v1204
        %1244 = vmatprep.subr.mxu0 0.0
        %1245 = vmatpush1.msra.mxu0 %v1203
        %1246 = vmatprep.subr.mxu0 0.0
        %1247 = vmatpush1.msra.mxu0 %v1202
        %1248 = vmatprep.subr.mxu0 0.0
        %1249 = vmatpush1.msra.mxu0 %v1201
        %1250 = vmatprep.subr.mxu0 0.0
        %1251 = vmatpush2.msra.mxu0 0.0
        %1252 = vmatprep.subr.mxu0 0.0
        %1253 = vmatpush2.msra.mxu0 0.0
        %1254 = vmatprep.subr.mxu0 0.0
        %1255 = vmatpush2.msra.mxu0 0.0
        %1256 = vmatprep.subr.mxu0 0.0
        %1257 = vmatpush2.msra.mxu0 0.0
        %1258 = vmatprep.subr.mxu0 0.0
        %1259 = vmatpush2.msra.mxu0 0.0
        %1260 = vmatprep.subr.mxu0 0.0
        %1261 = vmatpush2.msra.mxu0 0.0
        %1262 = vmatprep.subr.mxu0 0.0
        %1263 = vmatpush2.msra.mxu0 0.0
        %1264 = vmatprep.subr.mxu0 0.0
        %1265 = vmatpush2.msra.mxu0 0.0
        %1266 = vmatprep.subr.mxu0 0.0
        %1267 = vmatpush2.msra.mxu0 0.0
        %1268 = vmatprep.subr.mxu0 0.0
        %1269 = vmatpush2.msra.mxu0 0.0
        %1270 = vmatprep.subr.mxu0 0.0
        %1271 = vmatpush2.msra.mxu0 0.0
        %1272 = vmatprep.subr.mxu0 0.0
        %1273 = vmatpush2.msra.mxu0 0.0
        %1274 = vmatprep.subr.mxu0 0.0
        %1275 = vmatpush2.msra.mxu0 0.0
        %1276 = vmatprep.subr.mxu0 0.0
        %1277 = vmatpush2.msra.mxu0 0.0
        %1278 = vmatprep.subr.mxu0 0.0
        %1279 = vmatpush2.msra.mxu0 0.0
        %1280 = vmatprep.subr.mxu0 0.0
        %1281 = vmatpush2.msra.mxu0 0.0
        %1282 = vmatprep.mubr.f32.mxu0 0.0
        %1283 = vmatmul.mubr.f32.gmra.mxu0 %v1213
        %v1284 = vpop.f32.mrf.mxu0
        %v1285 = vadd.f32 %v1210, %v1284
        %v1286 = vpop.f32.mrf.mxu0
        %1287 = vmatprep.mubr.f32.mxu0 0.0
        %1288 = vmatmul.mubr.f32.gmra.mxu0 %v1216
        %v1289 = vpop.f32.mrf.mxu0
        %v1290 = vadd.f32 %v1210, %v1289
        %v1291 = vpop.f32.mrf.mxu0
        %1292 = vdwg.mxu0
        %v1293 = vmul.f32 %v1285, 0.5
        %v1294 = vmul.f32 %v1290, 0.5
        %v1295 = vmul.f32 %v1285, 0.70710677
        %v1296 = vmul.f32 %v1290, 0.70710677
        %v1297 = vand.u32 2147483647, %v1295
        %v1298 = vand.u32 2147483647, %v1296
        %v1299 = vmul.f32 %v1297, 0.3275911
        %v1300 = vmul.f32 %v1298, 0.3275911
        %v1301 = vadd.f32 %v1299, 1.0
        %v1302 = vadd.f32 %v1300, 1.0
        %v1303 = vrcp.pop %v1301
        %v1304 = vmul.f32 1.0, %v1303
        %v1305 = vrcp.pop %v1302
        %v1306 = vmul.f32 1.0, %v1305
        %v1307 = vmul.f32 %v1304, 1.0614054
        %v1308 = vmul.f32 %v1306, 1.0614054
        %v1309 = vadd.f32 %v1307, -1.4531521
        %v1310 = vadd.f32 %v1308, -1.4531521
        %v1311 = vmul.f32 %v1309, %v1304
        %v1312 = vmul.f32 %v1310, %v1306
        %v1313 = vadd.f32 %v1311, 1.4214138
        %v1314 = vadd.f32 %v1312, 1.4214138
        %v1315 = vmul.f32 %v1313, %v1304
        %v1316 = vmul.f32 %v1314, %v1306
        %v1317 = vadd.f32 %v1315, -0.28449672
        %v1318 = vadd.f32 %v1316, -0.28449672
        %v1319 = vmul.f32 %v1317, %v1304
        %v1320 = vmul.f32 %v1318, %v1306
        %v1321 = vadd.f32 %v1319, 0.2548296
        %v1322 = vadd.f32 %v1320, 0.2548296
        %v1323 = vmul.f32 %v1321, %v1304
        %v1324 = vmul.f32 %v1322, %v1306
        %v1325 = vsub.f32 0.0, %v1297
        %v1326 = vsub.f32 0.0, %v1298
        %v1327 = vmul.f32 %v1325, %v1297
        %v1328 = vmul.f32 %v1326, %v1298
        %v1329 = vmul.f32 %v1327, 1.442695
        %v1330 = vpow.pop %v1329
        %v1331 = vmul.f32 %v1328, 1.442695
        %v1332 = vpow.pop %v1331
        %v1333 = vmul.f32 %v1323, %v1330
        %v1334 = vmul.f32 %v1324, %v1332
        %v1335 = vsub.f32 1.0, %v1333
        %v1336 = vsub.f32 1.0, %v1334
        %vm1337 = vcmp.lt.f32.partialorder %v1295, 0.0
        %vm1338 = vcmp.lt.f32.partialorder %v1296, 0.0
        %v1339 = vsub.f32 0.0, %v1335
        %v1340 = vsub.f32 0.0, %v1336
        %v1341 = vsel %vm1337, %v1339, %v1335
        %v1342 = vsel %vm1338, %v1340, %v1336
        %v1343 = vadd.f32 %v1341, 1.0
        %v1344 = vadd.f32 %v1342, 1.0
        %v1345 = vmul.f32 %v1293, %v1343
        %v1346 = vmul.f32 %v1294, %v1344
        %v1347 = vld [vmem:[%s589] sm:$0xff]
        %v1348 = vld [vmem:[%s589 + $0x8] sm:$0xff]
        %v1349 = vld [vmem:[%s589 + $0x10] sm:$0xff]
        %v1350 = vld [vmem:[%s589 + $0x18] sm:$0xff]
        %v1351 = vld [vmem:[%s589 + $0x20] sm:$0xff]
        %v1352 = vld [vmem:[%s589 + $0x28] sm:$0xff]
        %v1353 = vld [vmem:[%s589 + $0x30] sm:$0xff]
        %v1354 = vld [vmem:[%s589 + $0x38] sm:$0xff]
        %v1355 = vld [vmem:[%s589 + $0x40] sm:$0xff]
        %v1356 = vld [vmem:[%s589 + $0x48] sm:$0xff]
        %v1357 = vld [vmem:[%s589 + $0x50] sm:$0xff]
        %v1358 = vld [vmem:[%s589 + $0x58] sm:$0xff]
        %v1359 = vld [vmem:[%s589 + $0x60] sm:$0xff]
        %v1360 = vld [vmem:[%s589 + $0x68] sm:$0xff]
        %v1361 = vld [vmem:[%s589 + $0x70] sm:$0xff]
        %v1362 = vld [vmem:[%s589 + $0x78] sm:$0xff]
        %v1363 = vld [vmem:[%s592] sm:$0x1]
        %v1365 = vlaneseq
        %v1366 = vshrl.u32 %v1365, 7
        %v1367 = vsub.s32 0, %v1366
        %v1368 = vrot.slane %v1363, %v1367
        %1370 = vmatprep.subr.mxu0 0.0
        %1371 = vmatpush1.msra.mxu0 %v1362
        %1372 = vmatprep.subr.mxu0 0.0
        %1373 = vmatpush1.msra.mxu0 %v1361
        %1374 = vmatprep.subr.mxu0 0.0
        %1375 = vmatpush1.msra.mxu0 %v1360
        %1376 = vmatprep.subr.mxu0 0.0
        %1377 = vmatpush1.msra.mxu0 %v1359
        %1378 = vmatprep.subr.mxu0 0.0
        %1379 = vmatpush1.msra.mxu0 %v1358
        %1380 = vmatprep.subr.mxu0 0.0
        %1381 = vmatpush1.msra.mxu0 %v1357
        %1382 = vmatprep.subr.mxu0 0.0
        %1383 = vmatpush1.msra.mxu0 %v1356
        %1384 = vmatprep.subr.mxu0 0.0
        %1385 = vmatpush1.msra.mxu0 %v1355
        %1386 = vmatprep.subr.mxu0 0.0
        %1387 = vmatpush1.msra.mxu0 %v1354
        %1388 = vmatprep.subr.mxu0 0.0
        %1389 = vmatpush1.msra.mxu0 %v1353
        %1390 = vmatprep.subr.mxu0 0.0
        %1391 = vmatpush1.msra.mxu0 %v1352
        %1392 = vmatprep.subr.mxu0 0.0
        %1393 = vmatpush1.msra.mxu0 %v1351
        %1394 = vmatprep.subr.mxu0 0.0
        %1395 = vmatpush1.msra.mxu0 %v1350
        %1396 = vmatprep.subr.mxu0 0.0
        %1397 = vmatpush1.msra.mxu0 %v1349
        %1398 = vmatprep.subr.mxu0 0.0
        %1399 = vmatpush1.msra.mxu0 %v1348
        %1400 = vmatprep.subr.mxu0 0.0
        %1401 = vmatpush1.msra.mxu0 %v1347
        %1402 = vmatprep.subr.mxu0 0.0
        %1403 = vmatpush2.msra.mxu0 0.0
        %1404 = vmatprep.subr.mxu0 0.0
        %1405 = vmatpush2.msra.mxu0 0.0
        %1406 = vmatprep.subr.mxu0 0.0
        %1407 = vmatpush2.msra.mxu0 0.0
        %1408 = vmatprep.subr.mxu0 0.0
        %1409 = vmatpush2.msra.mxu0 0.0
        %1410 = vmatprep.subr.mxu0 0.0
        %1411 = vmatpush2.msra.mxu0 0.0
        %1412 = vmatprep.subr.mxu0 0.0
        %1413 = vmatpush2.msra.mxu0 0.0
        %1414 = vmatprep.subr.mxu0 0.0
        %1415 = vmatpush2.msra.mxu0 0.0
        %1416 = vmatprep.subr.mxu0 0.0
        %1417 = vmatpush2.msra.mxu0 0.0
        %1418 = vmatprep.subr.mxu0 0.0
        %1419 = vmatpush2.msra.mxu0 0.0
        %1420 = vmatprep.subr.mxu0 0.0
        %1421 = vmatpush2.msra.mxu0 0.0
        %1422 = vmatprep.subr.mxu0 0.0
        %1423 = vmatpush2.msra.mxu0 0.0
        %1424 = vmatprep.subr.mxu0 0.0
        %1425 = vmatpush2.msra.mxu0 0.0
        %1426 = vmatprep.subr.mxu0 0.0
        %1427 = vmatpush2.msra.mxu0 0.0
        %1428 = vmatprep.subr.mxu0 0.0
        %1429 = vmatpush2.msra.mxu0 0.0
        %1430 = vmatprep.subr.mxu0 0.0
        %1431 = vmatpush2.msra.mxu0 0.0
        %1432 = vmatprep.subr.mxu0 0.0
        %1433 = vmatpush2.msra.mxu0 0.0
        %1434 = vmatprep.mubr.f32.mxu0 0.0
        %1435 = vmatmul.mubr.f32.gmra.mxu0 %v1345
        %v1436 = vpop.f32.mrf.mxu0
        %v1437 = vadd.f32 %v1368, %v1436
        %v1438 = vpop.f32.mrf.mxu0
        %1439 = vmatprep.mubr.f32.mxu0 0.0
        %1440 = vmatmul.mubr.f32.gmra.mxu0 %v1346
        %v1441 = vpop.f32.mrf.mxu0
        %v1442 = vadd.f32 %v1368, %v1441
        %v1443 = vpop.f32.mrf.mxu0
        %1444 = vdwg.mxu0
        %v1445 = vadd.f32 %v1199, %v1437
        %v1446 = vadd.f32 %v1200, %v1442
        %v1447 = vld [vmem:[%s595] sm:$0x1]
        %v1448 = vld [vmem:[%s598] sm:$0x1]
        %v1449 = vsel %vm621, %v1445, 0.0
        %1450 = vadd.xlane.f32.xlu0 %v1449
        %v1451 = vpop.xlane.xlu0 %1450
        %v1452 = vsel %vm621, %v1446, 0.0
        %1453 = vadd.xlane.f32.xlu0 %v1452
        %v1454 = vpop.xlane.xlu0 %1453
        %v1455 = vmul.f32 %v1451, %v1164
        %v1456 = vmul.f32 %v1454, %v1164
        %v1457 = vsub.f32 %v1445, %v1455
        %v1458 = vsub.f32 %v1446, %v1456
        %v1459 = vmul.f32 %v1457, %v1457
        %v1460 = vmul.f32 %v1458, %v1458
        %v1461 = vsel %vm621, %v1459, 0.0
        %1462 = vadd.xlane.f32.xlu0 %v1461
        %v1463 = vpop.xlane.xlu0 %1462
        %v1464 = vsel %vm621, %v1460, 0.0
        %1465 = vadd.xlane.f32.xlu0 %v1464
        %v1466 = vpop.xlane.xlu0 %1465
        %v1467 = vmul.f32 %v1463, %v1164
        %v1468 = vmul.f32 %v1466, %v1164
        %v1469 = vadd.f32 %v1467, 1e-05
        %v1470 = vadd.f32 %v1468, 1e-05
        %v1471 = vrsqrt.pop %v1469
        %v1472 = vrsqrt.pop %v1470
        %v1473 = vmul.f32 %v1457, %v1471
        %v1474 = vmul.f32 %v1458, %v1472
        %v1476 = vlaneseq
        %v1477 = vshrl.u32 %v1476, 7
        %v1478 = vsub.s32 0, %v1477
        %v1479 = vrot.slane %v1447, %v1478
        %v1481 = vmul.f32 %v1473, %v1479
        %v1482 = vmul.f32 %v1474, %v1479
        %v1484 = vlaneseq
        %v1485 = vshrl.u32 %v1484, 7
        %v1486 = vsub.s32 0, %v1485
        %v1487 = vrot.slane %v1448, %v1486
        %v1489 = vadd.f32 %v1481, %v1487
        %v1490 = vadd.f32 %v1482, %v1487
        %1491 = vst.msk [vmem:[#allocation2] sm:$0xff] %vm621, %v1489
        %1492 = vst.msk [vmem:[#allocation2 + $0x8] sm:$0xff] %vm621, %v1490
        %1493 = vst.msk [vmem:[#allocation3] sm:$0xff] %vm621, %v1489
        %1494 = vst.msk [vmem:[#allocation3 + $0x8] sm:$0xff] %vm621, %v1490
        // Predicated region
        $region77: #{tpu_custom_call.1} parent=71 // pred_check
          %p1495 = pneg %p371
        $region78: #{tpu_custom_call.1} parent=71 // pred_check_branch
          %1497 = sbr.rel (%p1495) target = $region80
        $region79: #{tpu_custom_call.1} parent=71 // pred_region
          %s1499 = ssub.s32 256, 256
          %1500 = vsyncadd [#allocation4], %s1499
          %s1501 = sshll.u32 [#allocation3], 4
          %s1502 = int_to_ptr.vmem [resolvable:$true] %s1501
          %1507 = dma.vmem_to_hbm [thread:$0]  %s1502, 256, %s13, [#allocation4], 128, 128, 8
        $region80: #{tpu_custom_call.1} parent=71 // pred_fallthru
          _
        // Predicated region
        $region81: #{tpu_custom_call.1} parent=71 // pred_check
          %p1508 = pneg %p371
        $region82: #{tpu_custom_call.1} parent=71 // pred_check_branch
          %1510 = sbr.rel (%p1508) target = $region84
        $region83: #{tpu_custom_call.1} parent=71 // pred_region
          %1511 = dma.done [#allocation4], 256
        $region84: #{tpu_custom_call.1} parent=71 // pred_fallthru
          _
      $region72: #{tpu_custom_call.1} parent=5 // pred_fallthru
        _
      %p1512 = scmp.le.s32.totalorder 2, %s20
      // Predicated region
      $region85: #{tpu_custom_call.1} parent=5 // pred_check
        %p1513 = pneg %p1512
      $region86: #{tpu_custom_call.1} parent=5 // pred_check_branch
        %1515 = sbr.rel (%p1513) target = $region88
      $region87: #{tpu_custom_call.1} parent=5 // pred_region
        %s1516 = ssub.s32 %s20, 2
      $region88: #{tpu_custom_call.1} parent=5 // pred_fallthru
        _
    $region6: #{tpu_custom_call.1} parent=1 // loop_footer
      %s24 = sadd.s32 1, %s20
    $region7: #{tpu_custom_call.1} parent=1 // loop_footer_branch
      %19 = sbr.rel target = $region3
    $region8: #{tpu_custom_call.1} parent=1 // loop_exit
      _
    %1517 = vsyncpa [#allocation4], 1
    %s1518 = scalar_lea.sflag [#allocation4], 1
    %1519 = vsyncpa %s1518, 1

</llo_original>
